<compile_context>
chip_gen: v7x
topology: tpu7x:2x2x1
jax: 0.10.0
libtpu: 0.0.40
codegen_flags: <defaults>
</compile_context>

<pallas_src>
from functools import partial

import jax
import jax.numpy as jnp
from jax import lax
from jax.experimental import pallas as pl
from jax.experimental.pallas import tpu as pltpu


# ----------------------------- Pallas kernel -------------------------------

def _lstm_cell_ifog(gates, c, H):
    """LSTM cell update with gate columns pre-permuted to (i, f, o, g). f32 math."""
    sig = jax.nn.sigmoid(gates[:, :3 * H])   # one EUP region: i, f, o together
    g = jnp.tanh(gates[:, 3 * H:])           # one EUP region: g
    i = sig[:, :H]
    f = sig[:, H:2 * H]
    o = sig[:, 2 * H:3 * H]
    c_new = f * c + i * g
    h_new = o * jnp.tanh(c_new)
    return h_new, c_new


def lstm_power_kernel(x_ref, wih1_ref, b1_ref, wstep_ref, b2_ref,
                      fw1_ref, fb1_ref, fw2_ref, fb2_ref,
                      out_ref, xw1_ref, *, batch):
    """Fused 2-layer LSTM + Linear(H,32)+ReLU+Linear(32,1).

    x_ref:     (T*Bp, F) f32, time-major, batch padded to Bp=8
    wih1_ref:  (F, 4H)   bf16, gate columns in (i,f,o,g) order
    b1_ref:    (1, 4H)   f32, bias_ih + bias_hh of layer 1
    wstep_ref: (2H, 8H)  bf16, fused recurrent weight [[wih2, whh1],[whh2, 0]]
    b2_ref:    (1, 4H)   f32, bias of layer 2
    fw1/fb1/fw2/fb2:     fc head params (weights bf16, biases f32)
    out_ref:   (Bp, 1)   f32
    xw1_ref:   (T*Bp, 4H) f32 VMEM scratch for the hoisted input projection
    """
    Bp = batch
    TB = x_ref.shape[0]
    T = TB // Bp
    H4 = b1_ref.shape[1]
    H = H4 // 4

    # Hoisted layer-1 input projection: one (T*Bp,F)x(F,4H) MXU matmul, off the
    # serial recurrence path, staged to VMEM scratch (not held in vregs).
    xw1_ref[...] = (jnp.dot(x_ref[...].astype(jnp.bfloat16), wih1_ref[...],
                            preferred_element_type=jnp.float32)
                    + b1_ref[...])

    h1 = jnp.zeros((Bp, H), jnp.float32)
    c1 = jnp.zeros((Bp, H), jnp.float32)
    h2 = jnp.zeros((Bp, H), jnp.float32)
    c2 = jnp.zeros((Bp, H), jnp.float32)
    hcon = jnp.zeros((Bp, H4), jnp.float32)   # h1(t-1) @ whh1 contribution to g1(t)

    # Fully unrolled time loop (T is small & static).  Per-step critical chain is
    # cell1 -> ONE fused matmul -> cell2; weights are re-read from VMEM each step.
    for t in range(T):
        # layer-1 gates: (x_t @ Wih1 + b1) + h1(t-1) @ Whh1   (slice is tile-aligned)
        g1 = xw1_ref[t * Bp:(t + 1) * Bp, :] + hcon
        h1, c1 = _lstm_cell_ifog(g1, c1, H)

        # ONE fused recurrent matmul:  [h1(t), h2(t-1)] @ [[wih2, whh1],[whh2, 0]]
        #   cols 0:4H  = h1(t)@wih2 + h2(t-1)@whh2   -> layer-2 gates (add b2)
        #   cols 4H:8H = h1(t)@whh1                   -> layer-1 h-term for step t+1
        m_in = jnp.concatenate([h1, h2], axis=-1).astype(jnp.bfloat16)
        m = jnp.dot(m_in, wstep_ref[...], preferred_element_type=jnp.float32)
        g2 = m[:, :H4] + b2_ref[...]
        hcon = m[:, H4:]
        h2, c2 = _lstm_cell_ifog(g2, c2, H)

    # fc head on the final layer-2 hidden state only.
    z = (jnp.dot(h2.astype(jnp.bfloat16), fw1_ref[...],
                 preferred_element_type=jnp.float32) + fb1_ref[...])
    z = jnp.maximum(z, 0.0)
    out_ref[...] = (jnp.dot(z.astype(jnp.bfloat16), fw2_ref[...],
                            preferred_element_type=jnp.float32) + fb2_ref[...])


# ------------------------------ JAX wrapper --------------------------------

def _permute_gates_ifog(w):
    """Permute last-axis gate blocks from PyTorch (i,f,g,o) to (i,f,o,g). Exact."""
    H = w.shape[-1] // 4
    i, f, g, o = (w[..., :H], w[..., H:2 * H], w[..., 2 * H:3 * H], w[..., 3 * H:])
    return jnp.concatenate([i, f, o, g], axis=-1)


def prepare_kernel_params(params):
    """One-time parameter prep: gate permutation, fused W_step, bf16 MXU weights."""
    assert len(params["lstm"]) == 2, "fused kernel implements the 2-layer module"
    l1, l2 = params["lstm"]
    fc = params["fc"]

    wih1 = _permute_gates_ifog(l1["wih"]).astype(jnp.bfloat16)   # (F, 4H)
    b1 = _permute_gates_ifog(l1["b"])                            # (1, 4H) f32
    whh1 = _permute_gates_ifog(l1["whh"])                        # (H, 4H)
    wih2 = _permute_gates_ifog(l2["wih"])                        # (H, 4H)
    whh2 = _permute_gates_ifog(l2["whh"])                        # (H, 4H)
    b2 = _permute_gates_ifog(l2["b"])                            # (1, 4H) f32

    # Block-structured fused per-step recurrent weight (zero block = free MACs).
    w_step = jnp.concatenate(
        [jnp.concatenate([wih2, whh1], axis=1),
         jnp.concatenate([whh2, jnp.zeros_like(whh2)], axis=1)],
        axis=0).astype(jnp.bfloat16)                             # (2H, 8H)

    return (wih1, b1, w_step, b2,
            fc["w1"].astype(jnp.bfloat16), fc["b1"],
            fc["w2"].astype(jnp.bfloat16), fc["b2"])


@jax.jit
def lstm_power_forward(x_btf, kernel_params):
    """x_btf: (B, T, F) float32 -> (B, 1) float32."""
    B, T, F = x_btf.shape
    Bp = max(8, ((B + 7) // 8) * 8)        # pad batch to the f32 sublane count
    H4 = kernel_params[1].shape[1]         # 4H

    # Single (jit-fused) layout op: time-major + batch-pad so every per-step slice
    # inside the kernel is (8,128)-tile aligned.  Pad rows are discarded below.
    x2d = jnp.pad(jnp.swapaxes(x_btf, 0, 1),
                  ((0, 0), (0, Bp - B), (0, 0))).reshape(T * Bp, F)

    vmem = pl.BlockSpec(memory_space=pltpu.MemorySpace.VMEM)
    out = pl.pallas_call(
        partial(lstm_power_kernel, batch=Bp),
        out_shape=jax.ShapeDtypeStruct((Bp, 1), jnp.float32),
        in_specs=[vmem] * (1 + len(kernel_params)),
        out_specs=vmem,
        scratch_shapes=[pltpu.VMEM((T * Bp, H4), jnp.float32)],
    )(x2d, *kernel_params)
    return out[:B]


# --------------------- deterministic parameter creation ---------------------

def init_params(key, n_feats, hidden=64, layers=2):
    """Parameters in PyTorch layout/order: gate order (i,f,g,o), bias_ih+bias_hh fused."""
    params = {"lstm": [], "fc": {}}
    bound = 1.0 / jnp.sqrt(hidden)
    in_size = n_feats
    for _ in range(layers):
        key, k1, k2, k3, k4 = jax.random.split(key, 5)
        wih = jax.random.uniform(k1, (in_size, 4 * hidden), jnp.float32, -bound, bound)
        whh = jax.random.uniform(k2, (hidden, 4 * hidden), jnp.float32, -bound, bound)
        b_ih = jax.random.uniform(k3, (4 * hidden,), jnp.float32, -bound, bound)
        b_hh = jax.random.uniform(k4, (4 * hidden,), jnp.float32, -bound, bound)
        params["lstm"].append({"wih": wih, "whh": whh,
                               "b": (b_ih + b_hh).reshape(1, 4 * hidden)})
        in_size = hidden
    key, k1, k2, k3, k4 = jax.random.split(key, 5)
    b1 = 1.0 / jnp.sqrt(hidden)
    b2 = 1.0 / jnp.sqrt(32.0)
    params["fc"]["w1"] = jax.random.uniform(k1, (hidden, 32), jnp.float32, -b1, b1)
    params["fc"]["b1"] = jax.random.uniform(k2, (1, 32), jnp.float32, -b1, b1)
    params["fc"]["w2"] = jax.random.uniform(k3, (32, 1), jnp.float32, -b2, b2)
    params["fc"]["b2"] = jax.random.uniform(k4, (1, 1), jnp.float32, -b2, b2)
    return params


# ----------------------------- pure-JAX reference ---------------------------

def reference_forward(x_btf, params):
    """Pure-JAX reference using PyTorch gate order (i,f,g,o), f32 weights."""
    seq = jnp.transpose(x_btf, (1, 0, 2))
    for lp in params["lstm"]:
        H = lp["whh"].shape[0]
        B = seq.shape[1]

        def step(carry, x_t, lp=lp, H=H):
            h, c = carry
            gates = x_t @ lp["wih"] + h @ lp["whh"] + lp["b"]
            i = jax.nn.sigmoid(gates[:, 0 * H:1 * H])
            f = jax.nn.sigmoid(gates[:, 1 * H:2 * H])
            g = jnp.tanh(gates[:, 2 * H:3 * H])
            o = jax.nn.sigmoid(gates[:, 3 * H:4 * H])
            c = f * c + i * g
            h = o * jnp.tanh(c)
            return (h, c), h

        init = (jnp.zeros((B, H), jnp.float32), jnp.zeros((B, H), jnp.float32))
        _, seq = lax.scan(step, init, seq)
    last = seq[-1]
    h = jnp.maximum(last @ params["fc"]["w1"] + params["fc"]["b1"], 0.0)
    return h @ params["fc"]["w2"] + params["fc"]["b2"]


# ---------------------------------- main ------------------------------------

if __name__ == "__main__":
    B, T, F, H, L = 2, 8, 4, 64, 2
    key = jax.random.PRNGKey(0)
    key, kx = jax.random.split(key)
    x = jax.random.normal(kx, (B, T, F), jnp.float32)   # (batch, seq, n_feats)
    params = init_params(key, n_feats=F, hidden=H, layers=L)

    kparams = prepare_kernel_params(params)             # one-time prep (permute/fuse/bf16)

    out = jax.block_until_ready(lstm_power_forward(x, kparams))
    ref = jax.block_until_ready(reference_forward(x, params))

    assert out.shape == (B, 1)
    # Tolerance sized for bf16 MXU operands (per perf review); observed deviation is
    # typically a few 1e-4 vs the f32 reference — 1e-2 leaves ample margin.
    assert jnp.allclose(out, ref, atol=1e-2, rtol=1e-2), (out, ref)
    print("KERNEL_OK")
</pallas_src>

<mosaic_0001>
module attributes {stable_mosaic.version = 11 : i64} {
  func.func @lstm_power_kernel(%arg0: memref<64x4xf32, #tpu.memory_space<vmem>>, %arg1: memref<4x256xbf16, #tpu.memory_space<vmem>>, %arg2: memref<1x256xf32, #tpu.memory_space<vmem>>, %arg3: memref<128x512xbf16, #tpu.memory_space<vmem>>, %arg4: memref<1x256xf32, #tpu.memory_space<vmem>>, %arg5: memref<64x32xbf16, #tpu.memory_space<vmem>>, %arg6: memref<1x32xf32, #tpu.memory_space<vmem>>, %arg7: memref<32x1xbf16, #tpu.memory_space<vmem>>, %arg8: memref<1x1xf32, #tpu.memory_space<vmem>>, %arg9: memref<8x1xf32, #tpu.memory_space<vmem>>, %arg10: memref<64x256xf32, #tpu.memory_space<vmem>>) attributes {dimension_semantics = [], scalar_prefetch = 0 : i64, scratch_operands = 1 : i64, tpu.core_type = #tpu.core_type<tc>} {
    %c0 = arith.constant 0 : index
    %c0_0 = arith.constant 0 : index
    %0 = vector.load %arg0[%c0, %c0_0] : memref<64x4xf32, #tpu.memory_space<vmem>>, vector<64x4xf32>
    %1 = arith.truncf %0 : vector<64x4xf32> to vector<64x4xbf16>
    %c0_1 = arith.constant 0 : index
    %c0_2 = arith.constant 0 : index
    %2 = vector.load %arg1[%c0_1, %c0_2] : memref<4x256xbf16, #tpu.memory_space<vmem>>, vector<4x256xbf16>
    %cst = arith.constant dense<0.000000e+00> : vector<64x256xf32>
    %3 = tpu.matmul %1, %2, %cst {dimension_numbers = #tpu.dot_dimension_numbers<[1], [0], [0], [1], [0, 0, 1, 1], [], []>} : vector<64x4xbf16>, vector<4x256xbf16>, vector<64x256xf32> -> vector<64x256xf32>
    %c0_3 = arith.constant 0 : index
    %c0_4 = arith.constant 0 : index
    %4 = vector.load %arg2[%c0_3, %c0_4] : memref<1x256xf32, #tpu.memory_space<vmem>>, vector<1x256xf32>
    %5 = vector.broadcast %4 : vector<1x256xf32> to vector<64x256xf32>
    %6 = arith.addf %3, %5 : vector<64x256xf32>
    %c0_5 = arith.constant 0 : index
    %c0_6 = arith.constant 0 : index
    %7 = vector.load %arg10[%c0_5, %c0_6] : memref<64x256xf32, #tpu.memory_space<vmem>>, vector<64x256xf32>
    tpu.vector_store %arg10[%c0_5, %c0_6], %6 {strides = array<i32>} : memref<64x256xf32, #tpu.memory_space<vmem>>, vector<64x256xf32>,
    %cst_7 = arith.constant 0.000000e+00 : f32
    %8 = vector.broadcast %cst_7 : f32 to vector<8x64xf32>
    %cst_8 = arith.constant 0.000000e+00 : f32
    %9 = vector.broadcast %cst_8 : f32 to vector<8x64xf32>
    %cst_9 = arith.constant 0.000000e+00 : f32
    %10 = vector.broadcast %cst_9 : f32 to vector<8x64xf32>
    %cst_10 = arith.constant 0.000000e+00 : f32
    %11 = vector.broadcast %cst_10 : f32 to vector<8x256xf32>
    %c0_11 = arith.constant 0 : index
    %c0_12 = arith.constant 0 : index
    %12 = vector.load %arg10[%c0_11, %c0_12] : memref<64x256xf32, #tpu.memory_space<vmem>>, vector<8x256xf32>
    %13 = arith.addf %12, %11 : vector<8x256xf32>
    %14 = vector.extract_strided_slice %13 {offsets = [0, 0], sizes = [8, 192], strides = [1, 1]} : vector<8x256xf32> to vector<8x192xf32>
    %15 = arith.negf %14 : vector<8x192xf32>
    %16 = math.exp %15 : vector<8x192xf32>
    %cst_13 = arith.constant 1.000000e+00 : f32
    %17 = vector.broadcast %cst_13 : f32 to vector<8x192xf32>
    %18 = arith.addf %17, %16 : vector<8x192xf32>
    %19 = arith.divf %17, %18 : vector<8x192xf32>
    %20 = vector.extract_strided_slice %13 {offsets = [0, 192], sizes = [8, 64], strides = [1, 1]} : vector<8x256xf32> to vector<8x64xf32>
    %21 = math.tanh %20 : vector<8x64xf32>
    %22 = vector.extract_strided_slice %19 {offsets = [0, 0], sizes = [8, 64], strides = [1, 1]} : vector<8x192xf32> to vector<8x64xf32>
    %23 = vector.extract_strided_slice %19 {offsets = [0, 64], sizes = [8, 64], strides = [1, 1]} : vector<8x192xf32> to vector<8x64xf32>
    %24 = vector.extract_strided_slice %19 {offsets = [0, 128], sizes = [8, 64], strides = [1, 1]} : vector<8x192xf32> to vector<8x64xf32>
    %25 = arith.mulf %23, %8 : vector<8x64xf32>
    %26 = arith.mulf %22, %21 : vector<8x64xf32>
    %27 = arith.addf %25, %26 : vector<8x64xf32>
    %28 = math.tanh %27 : vector<8x64xf32>
    %29 = arith.mulf %24, %28 : vector<8x64xf32>
    %30 = tpu.concatenate %29, %9 in 1 : vector<8x64xf32>, vector<8x64xf32> -> vector<8x128xf32>
    %31 = arith.truncf %30 : vector<8x128xf32> to vector<8x128xbf16>
    %c0_14 = arith.constant 0 : index
    %c0_15 = arith.constant 0 : index
    %32 = vector.load %arg3[%c0_14, %c0_15] : memref<128x512xbf16, #tpu.memory_space<vmem>>, vector<128x512xbf16>
    %cst_16 = arith.constant dense<0.000000e+00> : vector<8x512xf32>
    %33 = tpu.matmul %31, %32, %cst_16 {dimension_numbers = #tpu.dot_dimension_numbers<[1], [0], [0], [1], [0, 0, 1, 1], [], []>} : vector<8x128xbf16>, vector<128x512xbf16>, vector<8x512xf32> -> vector<8x512xf32>
    %34 = vector.extract_strided_slice %33 {offsets = [0, 0], sizes = [8, 256], strides = [1, 1]} : vector<8x512xf32> to vector<8x256xf32>
    %c0_17 = arith.constant 0 : index
    %c0_18 = arith.constant 0 : index
    %35 = vector.load %arg4[%c0_17, %c0_18] : memref<1x256xf32, #tpu.memory_space<vmem>>, vector<1x256xf32>
    %36 = vector.broadcast %35 : vector<1x256xf32> to vector<8x256xf32>
    %37 = arith.addf %34, %36 : vector<8x256xf32>
    %38 = vector.extract_strided_slice %33 {offsets = [0, 256], sizes = [8, 256], strides = [1, 1]} : vector<8x512xf32> to vector<8x256xf32>
    %39 = vector.extract_strided_slice %37 {offsets = [0, 0], sizes = [8, 192], strides = [1, 1]} : vector<8x256xf32> to vector<8x192xf32>
    %40 = arith.negf %39 : vector<8x192xf32>
    %41 = math.exp %40 : vector<8x192xf32>
    %cst_19 = arith.constant 1.000000e+00 : f32
    %42 = vector.broadcast %cst_19 : f32 to vector<8x192xf32>
    %43 = arith.addf %42, %41 : vector<8x192xf32>
    %44 = arith.divf %42, %43 : vector<8x192xf32>
    %45 = vector.extract_strided_slice %37 {offsets = [0, 192], sizes = [8, 64], strides = [1, 1]} : vector<8x256xf32> to vector<8x64xf32>
    %46 = math.tanh %45 : vector<8x64xf32>
    %47 = vector.extract_strided_slice %44 {offsets = [0, 0], sizes = [8, 64], strides = [1, 1]} : vector<8x192xf32> to vector<8x64xf32>
    %48 = vector.extract_strided_slice %44 {offsets = [0, 64], sizes = [8, 64], strides = [1, 1]} : vector<8x192xf32> to vector<8x64xf32>
    %49 = vector.extract_strided_slice %44 {offsets = [0, 128], sizes = [8, 64], strides = [1, 1]} : vector<8x192xf32> to vector<8x64xf32>
    %50 = arith.mulf %48, %10 : vector<8x64xf32>
    %51 = arith.mulf %47, %46 : vector<8x64xf32>
    %52 = arith.addf %50, %51 : vector<8x64xf32>
    %53 = math.tanh %52 : vector<8x64xf32>
    %54 = arith.mulf %49, %53 : vector<8x64xf32>
    %c8 = arith.constant 8 : index
    %c0_20 = arith.constant 0 : index
    %55 = vector.load %arg10[%c8, %c0_20] : memref<64x256xf32, #tpu.memory_space<vmem>>, vector<8x256xf32>
    %56 = arith.addf %55, %38 : vector<8x256xf32>
    %57 = vector.extract_strided_slice %56 {offsets = [0, 0], sizes = [8, 192], strides = [1, 1]} : vector<8x256xf32> to vector<8x192xf32>
    %58 = arith.negf %57 : vector<8x192xf32>
    %59 = math.exp %58 : vector<8x192xf32>
    %cst_21 = arith.constant 1.000000e+00 : f32
    %60 = vector.broadcast %cst_21 : f32 to vector<8x192xf32>
    %61 = arith.addf %60, %59 : vector<8x192xf32>
    %62 = arith.divf %60, %61 : vector<8x192xf32>
    %63 = vector.extract_strided_slice %56 {offsets = [0, 192], sizes = [8, 64], strides = [1, 1]} : vector<8x256xf32> to vector<8x64xf32>
    %64 = math.tanh %63 : vector<8x64xf32>
    %65 = vector.extract_strided_slice %62 {offsets = [0, 0], sizes = [8, 64], strides = [1, 1]} : vector<8x192xf32> to vector<8x64xf32>
    %66 = vector.extract_strided_slice %62 {offsets = [0, 64], sizes = [8, 64], strides = [1, 1]} : vector<8x192xf32> to vector<8x64xf32>
    %67 = vector.extract_strided_slice %62 {offsets = [0, 128], sizes = [8, 64], strides = [1, 1]} : vector<8x192xf32> to vector<8x64xf32>
    %68 = arith.mulf %66, %27 : vector<8x64xf32>
    %69 = arith.mulf %65, %64 : vector<8x64xf32>
    %70 = arith.addf %68, %69 : vector<8x64xf32>
    %71 = math.tanh %70 : vector<8x64xf32>
    %72 = arith.mulf %67, %71 : vector<8x64xf32>
    %73 = tpu.concatenate %72, %54 in 1 : vector<8x64xf32>, vector<8x64xf32> -> vector<8x128xf32>
    %74 = arith.truncf %73 : vector<8x128xf32> to vector<8x128xbf16>
    %c0_22 = arith.constant 0 : index
    %c0_23 = arith.constant 0 : index
    %75 = vector.load %arg3[%c0_22, %c0_23] : memref<128x512xbf16, #tpu.memory_space<vmem>>, vector<128x512xbf16>
    %cst_24 = arith.constant dense<0.000000e+00> : vector<8x512xf32>
    %76 = tpu.matmul %74, %75, %cst_24 {dimension_numbers = #tpu.dot_dimension_numbers<[1], [0], [0], [1], [0, 0, 1, 1], [], []>} : vector<8x128xbf16>, vector<128x512xbf16>, vector<8x512xf32> -> vector<8x512xf32>
    %77 = vector.extract_strided_slice %76 {offsets = [0, 0], sizes = [8, 256], strides = [1, 1]} : vector<8x512xf32> to vector<8x256xf32>
    %c0_25 = arith.constant 0 : index
    %c0_26 = arith.constant 0 : index
    %78 = vector.load %arg4[%c0_25, %c0_26] : memref<1x256xf32, #tpu.memory_space<vmem>>, vector<1x256xf32>
    %79 = vector.broadcast %78 : vector<1x256xf32> to vector<8x256xf32>
    %80 = arith.addf %77, %79 : vector<8x256xf32>
    %81 = vector.extract_strided_slice %76 {offsets = [0, 256], sizes = [8, 256], strides = [1, 1]} : vector<8x512xf32> to vector<8x256xf32>
    %82 = vector.extract_strided_slice %80 {offsets = [0, 0], sizes = [8, 192], strides = [1, 1]} : vector<8x256xf32> to vector<8x192xf32>
    %83 = arith.negf %82 : vector<8x192xf32>
    %84 = math.exp %83 : vector<8x192xf32>
    %cst_27 = arith.constant 1.000000e+00 : f32
    %85 = vector.broadcast %cst_27 : f32 to vector<8x192xf32>
    %86 = arith.addf %85, %84 : vector<8x192xf32>
    %87 = arith.divf %85, %86 : vector<8x192xf32>
    %88 = vector.extract_strided_slice %80 {offsets = [0, 192], sizes = [8, 64], strides = [1, 1]} : vector<8x256xf32> to vector<8x64xf32>
    %89 = math.tanh %88 : vector<8x64xf32>
    %90 = vector.extract_strided_slice %87 {offsets = [0, 0], sizes = [8, 64], strides = [1, 1]} : vector<8x192xf32> to vector<8x64xf32>
    %91 = vector.extract_strided_slice %87 {offsets = [0, 64], sizes = [8, 64], strides = [1, 1]} : vector<8x192xf32> to vector<8x64xf32>
    %92 = vector.extract_strided_slice %87 {offsets = [0, 128], sizes = [8, 64], strides = [1, 1]} : vector<8x192xf32> to vector<8x64xf32>
    %93 = arith.mulf %91, %52 : vector<8x64xf32>
    %94 = arith.mulf %90, %89 : vector<8x64xf32>
    %95 = arith.addf %93, %94 : vector<8x64xf32>
    %96 = math.tanh %95 : vector<8x64xf32>
    %97 = arith.mulf %92, %96 : vector<8x64xf32>
    %c16 = arith.constant 16 : index
    %c0_28 = arith.constant 0 : index
    %98 = vector.load %arg10[%c16, %c0_28] : memref<64x256xf32, #tpu.memory_space<vmem>>, vector<8x256xf32>
    %99 = arith.addf %98, %81 : vector<8x256xf32>
    %100 = vector.extract_strided_slice %99 {offsets = [0, 0], sizes = [8, 192], strides = [1, 1]} : vector<8x256xf32> to vector<8x192xf32>
    %101 = arith.negf %100 : vector<8x192xf32>
    %102 = math.exp %101 : vector<8x192xf32>
    %cst_29 = arith.constant 1.000000e+00 : f32
    %103 = vector.broadcast %cst_29 : f32 to vector<8x192xf32>
    %104 = arith.addf %103, %102 : vector<8x192xf32>
    %105 = arith.divf %103, %104 : vector<8x192xf32>
    %106 = vector.extract_strided_slice %99 {offsets = [0, 192], sizes = [8, 64], strides = [1, 1]} : vector<8x256xf32> to vector<8x64xf32>
    %107 = math.tanh %106 : vector<8x64xf32>
    %108 = vector.extract_strided_slice %105 {offsets = [0, 0], sizes = [8, 64], strides = [1, 1]} : vector<8x192xf32> to vector<8x64xf32>
    %109 = vector.extract_strided_slice %105 {offsets = [0, 64], sizes = [8, 64], strides = [1, 1]} : vector<8x192xf32> to vector<8x64xf32>
    %110 = vector.extract_strided_slice %105 {offsets = [0, 128], sizes = [8, 64], strides = [1, 1]} : vector<8x192xf32> to vector<8x64xf32>
    %111 = arith.mulf %109, %70 : vector<8x64xf32>
    %112 = arith.mulf %108, %107 : vector<8x64xf32>
    %113 = arith.addf %111, %112 : vector<8x64xf32>
    %114 = math.tanh %113 : vector<8x64xf32>
    %115 = arith.mulf %110, %114 : vector<8x64xf32>
    %116 = tpu.concatenate %115, %97 in 1 : vector<8x64xf32>, vector<8x64xf32> -> vector<8x128xf32>
    %117 = arith.truncf %116 : vector<8x128xf32> to vector<8x128xbf16>
    %c0_30 = arith.constant 0 : index
    %c0_31 = arith.constant 0 : index
    %118 = vector.load %arg3[%c0_30, %c0_31] : memref<128x512xbf16, #tpu.memory_space<vmem>>, vector<128x512xbf16>
    %cst_32 = arith.constant dense<0.000000e+00> : vector<8x512xf32>
    %119 = tpu.matmul %117, %118, %cst_32 {dimension_numbers = #tpu.dot_dimension_numbers<[1], [0], [0], [1], [0, 0, 1, 1], [], []>} : vector<8x128xbf16>, vector<128x512xbf16>, vector<8x512xf32> -> vector<8x512xf32>
    %120 = vector.extract_strided_slice %119 {offsets = [0, 0], sizes = [8, 256], strides = [1, 1]} : vector<8x512xf32> to vector<8x256xf32>
    %c0_33 = arith.constant 0 : index
    %c0_34 = arith.constant 0 : index
    %121 = vector.load %arg4[%c0_33, %c0_34] : memref<1x256xf32, #tpu.memory_space<vmem>>, vector<1x256xf32>
    %122 = vector.broadcast %121 : vector<1x256xf32> to vector<8x256xf32>
    %123 = arith.addf %120, %122 : vector<8x256xf32>
    %124 = vector.extract_strided_slice %119 {offsets = [0, 256], sizes = [8, 256], strides = [1, 1]} : vector<8x512xf32> to vector<8x256xf32>
    %125 = vector.extract_strided_slice %123 {offsets = [0, 0], sizes = [8, 192], strides = [1, 1]} : vector<8x256xf32> to vector<8x192xf32>
    %126 = arith.negf %125 : vector<8x192xf32>
    %127 = math.exp %126 : vector<8x192xf32>
    %cst_35 = arith.constant 1.000000e+00 : f32
    %128 = vector.broadcast %cst_35 : f32 to vector<8x192xf32>
    %129 = arith.addf %128, %127 : vector<8x192xf32>
    %130 = arith.divf %128, %129 : vector<8x192xf32>
    %131 = vector.extract_strided_slice %123 {offsets = [0, 192], sizes = [8, 64], strides = [1, 1]} : vector<8x256xf32> to vector<8x64xf32>
    %132 = math.tanh %131 : vector<8x64xf32>
    %133 = vector.extract_strided_slice %130 {offsets = [0, 0], sizes = [8, 64], strides = [1, 1]} : vector<8x192xf32> to vector<8x64xf32>
    %134 = vector.extract_strided_slice %130 {offsets = [0, 64], sizes = [8, 64], strides = [1, 1]} : vector<8x192xf32> to vector<8x64xf32>
    %135 = vector.extract_strided_slice %130 {offsets = [0, 128], sizes = [8, 64], strides = [1, 1]} : vector<8x192xf32> to vector<8x64xf32>
    %136 = arith.mulf %134, %95 : vector<8x64xf32>
    %137 = arith.mulf %133, %132 : vector<8x64xf32>
    %138 = arith.addf %136, %137 : vector<8x64xf32>
    %139 = math.tanh %138 : vector<8x64xf32>
    %140 = arith.mulf %135, %139 : vector<8x64xf32>
    %c24 = arith.constant 24 : index
    %c0_36 = arith.constant 0 : index
    %141 = vector.load %arg10[%c24, %c0_36] : memref<64x256xf32, #tpu.memory_space<vmem>>, vector<8x256xf32>
    %142 = arith.addf %141, %124 : vector<8x256xf32>
    %143 = vector.extract_strided_slice %142 {offsets = [0, 0], sizes = [8, 192], strides = [1, 1]} : vector<8x256xf32> to vector<8x192xf32>
    %144 = arith.negf %143 : vector<8x192xf32>
    %145 = math.exp %144 : vector<8x192xf32>
    %cst_37 = arith.constant 1.000000e+00 : f32
    %146 = vector.broadcast %cst_37 : f32 to vector<8x192xf32>
    %147 = arith.addf %146, %145 : vector<8x192xf32>
    %148 = arith.divf %146, %147 : vector<8x192xf32>
    %149 = vector.extract_strided_slice %142 {offsets = [0, 192], sizes = [8, 64], strides = [1, 1]} : vector<8x256xf32> to vector<8x64xf32>
    %150 = math.tanh %149 : vector<8x64xf32>
    %151 = vector.extract_strided_slice %148 {offsets = [0, 0], sizes = [8, 64], strides = [1, 1]} : vector<8x192xf32> to vector<8x64xf32>
    %152 = vector.extract_strided_slice %148 {offsets = [0, 64], sizes = [8, 64], strides = [1, 1]} : vector<8x192xf32> to vector<8x64xf32>
    %153 = vector.extract_strided_slice %148 {offsets = [0, 128], sizes = [8, 64], strides = [1, 1]} : vector<8x192xf32> to vector<8x64xf32>
    %154 = arith.mulf %152, %113 : vector<8x64xf32>
    %155 = arith.mulf %151, %150 : vector<8x64xf32>
    %156 = arith.addf %154, %155 : vector<8x64xf32>
    %157 = math.tanh %156 : vector<8x64xf32>
    %158 = arith.mulf %153, %157 : vector<8x64xf32>
    %159 = tpu.concatenate %158, %140 in 1 : vector<8x64xf32>, vector<8x64xf32> -> vector<8x128xf32>
    %160 = arith.truncf %159 : vector<8x128xf32> to vector<8x128xbf16>
    %c0_38 = arith.constant 0 : index
    %c0_39 = arith.constant 0 : index
    %161 = vector.load %arg3[%c0_38, %c0_39] : memref<128x512xbf16, #tpu.memory_space<vmem>>, vector<128x512xbf16>
    %cst_40 = arith.constant dense<0.000000e+00> : vector<8x512xf32>
    %162 = tpu.matmul %160, %161, %cst_40 {dimension_numbers = #tpu.dot_dimension_numbers<[1], [0], [0], [1], [0, 0, 1, 1], [], []>} : vector<8x128xbf16>, vector<128x512xbf16>, vector<8x512xf32> -> vector<8x512xf32>
    %163 = vector.extract_strided_slice %162 {offsets = [0, 0], sizes = [8, 256], strides = [1, 1]} : vector<8x512xf32> to vector<8x256xf32>
    %c0_41 = arith.constant 0 : index
    %c0_42 = arith.constant 0 : index
    %164 = vector.load %arg4[%c0_41, %c0_42] : memref<1x256xf32, #tpu.memory_space<vmem>>, vector<1x256xf32>
    %165 = vector.broadcast %164 : vector<1x256xf32> to vector<8x256xf32>
    %166 = arith.addf %163, %165 : vector<8x256xf32>
    %167 = vector.extract_strided_slice %162 {offsets = [0, 256], sizes = [8, 256], strides = [1, 1]} : vector<8x512xf32> to vector<8x256xf32>
    %168 = vector.extract_strided_slice %166 {offsets = [0, 0], sizes = [8, 192], strides = [1, 1]} : vector<8x256xf32> to vector<8x192xf32>
    %169 = arith.negf %168 : vector<8x192xf32>
    %170 = math.exp %169 : vector<8x192xf32>
    %cst_43 = arith.constant 1.000000e+00 : f32
    %171 = vector.broadcast %cst_43 : f32 to vector<8x192xf32>
    %172 = arith.addf %171, %170 : vector<8x192xf32>
    %173 = arith.divf %171, %172 : vector<8x192xf32>
    %174 = vector.extract_strided_slice %166 {offsets = [0, 192], sizes = [8, 64], strides = [1, 1]} : vector<8x256xf32> to vector<8x64xf32>
    %175 = math.tanh %174 : vector<8x64xf32>
    %176 = vector.extract_strided_slice %173 {offsets = [0, 0], sizes = [8, 64], strides = [1, 1]} : vector<8x192xf32> to vector<8x64xf32>
    %177 = vector.extract_strided_slice %173 {offsets = [0, 64], sizes = [8, 64], strides = [1, 1]} : vector<8x192xf32> to vector<8x64xf32>
    %178 = vector.extract_strided_slice %173 {offsets = [0, 128], sizes = [8, 64], strides = [1, 1]} : vector<8x192xf32> to vector<8x64xf32>
    %179 = arith.mulf %177, %138 : vector<8x64xf32>
    %180 = arith.mulf %176, %175 : vector<8x64xf32>
    %181 = arith.addf %179, %180 : vector<8x64xf32>
    %182 = math.tanh %181 : vector<8x64xf32>
    %183 = arith.mulf %178, %182 : vector<8x64xf32>
    %c32 = arith.constant 32 : index
    %c0_44 = arith.constant 0 : index
    %184 = vector.load %arg10[%c32, %c0_44] : memref<64x256xf32, #tpu.memory_space<vmem>>, vector<8x256xf32>
    %185 = arith.addf %184, %167 : vector<8x256xf32>
    %186 = vector.extract_strided_slice %185 {offsets = [0, 0], sizes = [8, 192], strides = [1, 1]} : vector<8x256xf32> to vector<8x192xf32>
    %187 = arith.negf %186 : vector<8x192xf32>
    %188 = math.exp %187 : vector<8x192xf32>
    %cst_45 = arith.constant 1.000000e+00 : f32
    %189 = vector.broadcast %cst_45 : f32 to vector<8x192xf32>
    %190 = arith.addf %189, %188 : vector<8x192xf32>
    %191 = arith.divf %189, %190 : vector<8x192xf32>
    %192 = vector.extract_strided_slice %185 {offsets = [0, 192], sizes = [8, 64], strides = [1, 1]} : vector<8x256xf32> to vector<8x64xf32>
    %193 = math.tanh %192 : vector<8x64xf32>
    %194 = vector.extract_strided_slice %191 {offsets = [0, 0], sizes = [8, 64], strides = [1, 1]} : vector<8x192xf32> to vector<8x64xf32>
    %195 = vector.extract_strided_slice %191 {offsets = [0, 64], sizes = [8, 64], strides = [1, 1]} : vector<8x192xf32> to vector<8x64xf32>
    %196 = vector.extract_strided_slice %191 {offsets = [0, 128], sizes = [8, 64], strides = [1, 1]} : vector<8x192xf32> to vector<8x64xf32>
    %197 = arith.mulf %195, %156 : vector<8x64xf32>
    %198 = arith.mulf %194, %193 : vector<8x64xf32>
    %199 = arith.addf %197, %198 : vector<8x64xf32>
    %200 = math.tanh %199 : vector<8x64xf32>
    %201 = arith.mulf %196, %200 : vector<8x64xf32>
    %202 = tpu.concatenate %201, %183 in 1 : vector<8x64xf32>, vector<8x64xf32> -> vector<8x128xf32>
    %203 = arith.truncf %202 : vector<8x128xf32> to vector<8x128xbf16>
    %c0_46 = arith.constant 0 : index
    %c0_47 = arith.constant 0 : index
    %204 = vector.load %arg3[%c0_46, %c0_47] : memref<128x512xbf16, #tpu.memory_space<vmem>>, vector<128x512xbf16>
    %cst_48 = arith.constant dense<0.000000e+00> : vector<8x512xf32>
    %205 = tpu.matmul %203, %204, %cst_48 {dimension_numbers = #tpu.dot_dimension_numbers<[1], [0], [0], [1], [0, 0, 1, 1], [], []>} : vector<8x128xbf16>, vector<128x512xbf16>, vector<8x512xf32> -> vector<8x512xf32>
    %206 = vector.extract_strided_slice %205 {offsets = [0, 0], sizes = [8, 256], strides = [1, 1]} : vector<8x512xf32> to vector<8x256xf32>
    %c0_49 = arith.constant 0 : index
    %c0_50 = arith.constant 0 : index
    %207 = vector.load %arg4[%c0_49, %c0_50] : memref<1x256xf32, #tpu.memory_space<vmem>>, vector<1x256xf32>
    %208 = vector.broadcast %207 : vector<1x256xf32> to vector<8x256xf32>
    %209 = arith.addf %206, %208 : vector<8x256xf32>
    %210 = vector.extract_strided_slice %205 {offsets = [0, 256], sizes = [8, 256], strides = [1, 1]} : vector<8x512xf32> to vector<8x256xf32>
    %211 = vector.extract_strided_slice %209 {offsets = [0, 0], sizes = [8, 192], strides = [1, 1]} : vector<8x256xf32> to vector<8x192xf32>
    %212 = arith.negf %211 : vector<8x192xf32>
    %213 = math.exp %212 : vector<8x192xf32>
    %cst_51 = arith.constant 1.000000e+00 : f32
    %214 = vector.broadcast %cst_51 : f32 to vector<8x192xf32>
    %215 = arith.addf %214, %213 : vector<8x192xf32>
    %216 = arith.divf %214, %215 : vector<8x192xf32>
    %217 = vector.extract_strided_slice %209 {offsets = [0, 192], sizes = [8, 64], strides = [1, 1]} : vector<8x256xf32> to vector<8x64xf32>
    %218 = math.tanh %217 : vector<8x64xf32>
    %219 = vector.extract_strided_slice %216 {offsets = [0, 0], sizes = [8, 64], strides = [1, 1]} : vector<8x192xf32> to vector<8x64xf32>
    %220 = vector.extract_strided_slice %216 {offsets = [0, 64], sizes = [8, 64], strides = [1, 1]} : vector<8x192xf32> to vector<8x64xf32>
    %221 = vector.extract_strided_slice %216 {offsets = [0, 128], sizes = [8, 64], strides = [1, 1]} : vector<8x192xf32> to vector<8x64xf32>
    %222 = arith.mulf %220, %181 : vector<8x64xf32>
    %223 = arith.mulf %219, %218 : vector<8x64xf32>
    %224 = arith.addf %222, %223 : vector<8x64xf32>
    %225 = math.tanh %224 : vector<8x64xf32>
    %226 = arith.mulf %221, %225 : vector<8x64xf32>
    %c40 = arith.constant 40 : index
    %c0_52 = arith.constant 0 : index
    %227 = vector.load %arg10[%c40, %c0_52] : memref<64x256xf32, #tpu.memory_space<vmem>>, vector<8x256xf32>
    %228 = arith.addf %227, %210 : vector<8x256xf32>
    %229 = vector.extract_strided_slice %228 {offsets = [0, 0], sizes = [8, 192], strides = [1, 1]} : vector<8x256xf32> to vector<8x192xf32>
    %230 = arith.negf %229 : vector<8x192xf32>
    %231 = math.exp %230 : vector<8x192xf32>
    %cst_53 = arith.constant 1.000000e+00 : f32
    %232 = vector.broadcast %cst_53 : f32 to vector<8x192xf32>
    %233 = arith.addf %232, %231 : vector<8x192xf32>
    %234 = arith.divf %232, %233 : vector<8x192xf32>
    %235 = vector.extract_strided_slice %228 {offsets = [0, 192], sizes = [8, 64], strides = [1, 1]} : vector<8x256xf32> to vector<8x64xf32>
    %236 = math.tanh %235 : vector<8x64xf32>
    %237 = vector.extract_strided_slice %234 {offsets = [0, 0], sizes = [8, 64], strides = [1, 1]} : vector<8x192xf32> to vector<8x64xf32>
    %238 = vector.extract_strided_slice %234 {offsets = [0, 64], sizes = [8, 64], strides = [1, 1]} : vector<8x192xf32> to vector<8x64xf32>
    %239 = vector.extract_strided_slice %234 {offsets = [0, 128], sizes = [8, 64], strides = [1, 1]} : vector<8x192xf32> to vector<8x64xf32>
    %240 = arith.mulf %238, %199 : vector<8x64xf32>
    %241 = arith.mulf %237, %236 : vector<8x64xf32>
    %242 = arith.addf %240, %241 : vector<8x64xf32>
    %243 = math.tanh %242 : vector<8x64xf32>
    %244 = arith.mulf %239, %243 : vector<8x64xf32>
    %245 = tpu.concatenate %244, %226 in 1 : vector<8x64xf32>, vector<8x64xf32> -> vector<8x128xf32>
    %246 = arith.truncf %245 : vector<8x128xf32> to vector<8x128xbf16>
    %c0_54 = arith.constant 0 : index
    %c0_55 = arith.constant 0 : index
    %247 = vector.load %arg3[%c0_54, %c0_55] : memref<128x512xbf16, #tpu.memory_space<vmem>>, vector<128x512xbf16>
    %cst_56 = arith.constant dense<0.000000e+00> : vector<8x512xf32>
    %248 = tpu.matmul %246, %247, %cst_56 {dimension_numbers = #tpu.dot_dimension_numbers<[1], [0], [0], [1], [0, 0, 1, 1], [], []>} : vector<8x128xbf16>, vector<128x512xbf16>, vector<8x512xf32> -> vector<8x512xf32>
    %249 = vector.extract_strided_slice %248 {offsets = [0, 0], sizes = [8, 256], strides = [1, 1]} : vector<8x512xf32> to vector<8x256xf32>
    %c0_57 = arith.constant 0 : index
    %c0_58 = arith.constant 0 : index
    %250 = vector.load %arg4[%c0_57, %c0_58] : memref<1x256xf32, #tpu.memory_space<vmem>>, vector<1x256xf32>
    %251 = vector.broadcast %250 : vector<1x256xf32> to vector<8x256xf32>
    %252 = arith.addf %249, %251 : vector<8x256xf32>
    %253 = vector.extract_strided_slice %248 {offsets = [0, 256], sizes = [8, 256], strides = [1, 1]} : vector<8x512xf32> to vector<8x256xf32>
    %254 = vector.extract_strided_slice %252 {offsets = [0, 0], sizes = [8, 192], strides = [1, 1]} : vector<8x256xf32> to vector<8x192xf32>
    %255 = arith.negf %254 : vector<8x192xf32>
    %256 = math.exp %255 : vector<8x192xf32>
    %cst_59 = arith.constant 1.000000e+00 : f32
    %257 = vector.broadcast %cst_59 : f32 to vector<8x192xf32>
    %258 = arith.addf %257, %256 : vector<8x192xf32>
    %259 = arith.divf %257, %258 : vector<8x192xf32>
    %260 = vector.extract_strided_slice %252 {offsets = [0, 192], sizes = [8, 64], strides = [1, 1]} : vector<8x256xf32> to vector<8x64xf32>
    %261 = math.tanh %260 : vector<8x64xf32>
    %262 = vector.extract_strided_slice %259 {offsets = [0, 0], sizes = [8, 64], strides = [1, 1]} : vector<8x192xf32> to vector<8x64xf32>
    %263 = vector.extract_strided_slice %259 {offsets = [0, 64], sizes = [8, 64], strides = [1, 1]} : vector<8x192xf32> to vector<8x64xf32>
    %264 = vector.extract_strided_slice %259 {offsets = [0, 128], sizes = [8, 64], strides = [1, 1]} : vector<8x192xf32> to vector<8x64xf32>
    %265 = arith.mulf %263, %224 : vector<8x64xf32>
    %266 = arith.mulf %262, %261 : vector<8x64xf32>
    %267 = arith.addf %265, %266 : vector<8x64xf32>
    %268 = math.tanh %267 : vector<8x64xf32>
    %269 = arith.mulf %264, %268 : vector<8x64xf32>
    %c48 = arith.constant 48 : index
    %c0_60 = arith.constant 0 : index
    %270 = vector.load %arg10[%c48, %c0_60] : memref<64x256xf32, #tpu.memory_space<vmem>>, vector<8x256xf32>
    %271 = arith.addf %270, %253 : vector<8x256xf32>
    %272 = vector.extract_strided_slice %271 {offsets = [0, 0], sizes = [8, 192], strides = [1, 1]} : vector<8x256xf32> to vector<8x192xf32>
    %273 = arith.negf %272 : vector<8x192xf32>
    %274 = math.exp %273 : vector<8x192xf32>
    %cst_61 = arith.constant 1.000000e+00 : f32
    %275 = vector.broadcast %cst_61 : f32 to vector<8x192xf32>
    %276 = arith.addf %275, %274 : vector<8x192xf32>
    %277 = arith.divf %275, %276 : vector<8x192xf32>
    %278 = vector.extract_strided_slice %271 {offsets = [0, 192], sizes = [8, 64], strides = [1, 1]} : vector<8x256xf32> to vector<8x64xf32>
    %279 = math.tanh %278 : vector<8x64xf32>
    %280 = vector.extract_strided_slice %277 {offsets = [0, 0], sizes = [8, 64], strides = [1, 1]} : vector<8x192xf32> to vector<8x64xf32>
    %281 = vector.extract_strided_slice %277 {offsets = [0, 64], sizes = [8, 64], strides = [1, 1]} : vector<8x192xf32> to vector<8x64xf32>
    %282 = vector.extract_strided_slice %277 {offsets = [0, 128], sizes = [8, 64], strides = [1, 1]} : vector<8x192xf32> to vector<8x64xf32>
    %283 = arith.mulf %281, %242 : vector<8x64xf32>
    %284 = arith.mulf %280, %279 : vector<8x64xf32>
    %285 = arith.addf %283, %284 : vector<8x64xf32>
    %286 = math.tanh %285 : vector<8x64xf32>
    %287 = arith.mulf %282, %286 : vector<8x64xf32>
    %288 = tpu.concatenate %287, %269 in 1 : vector<8x64xf32>, vector<8x64xf32> -> vector<8x128xf32>
    %289 = arith.truncf %288 : vector<8x128xf32> to vector<8x128xbf16>
    %c0_62 = arith.constant 0 : index
    %c0_63 = arith.constant 0 : index
    %290 = vector.load %arg3[%c0_62, %c0_63] : memref<128x512xbf16, #tpu.memory_space<vmem>>, vector<128x512xbf16>
    %cst_64 = arith.constant dense<0.000000e+00> : vector<8x512xf32>
    %291 = tpu.matmul %289, %290, %cst_64 {dimension_numbers = #tpu.dot_dimension_numbers<[1], [0], [0], [1], [0, 0, 1, 1], [], []>} : vector<8x128xbf16>, vector<128x512xbf16>, vector<8x512xf32> -> vector<8x512xf32>
    %292 = vector.extract_strided_slice %291 {offsets = [0, 0], sizes = [8, 256], strides = [1, 1]} : vector<8x512xf32> to vector<8x256xf32>
    %c0_65 = arith.constant 0 : index
    %c0_66 = arith.constant 0 : index
    %293 = vector.load %arg4[%c0_65, %c0_66] : memref<1x256xf32, #tpu.memory_space<vmem>>, vector<1x256xf32>
    %294 = vector.broadcast %293 : vector<1x256xf32> to vector<8x256xf32>
    %295 = arith.addf %292, %294 : vector<8x256xf32>
    %296 = vector.extract_strided_slice %291 {offsets = [0, 256], sizes = [8, 256], strides = [1, 1]} : vector<8x512xf32> to vector<8x256xf32>
    %297 = vector.extract_strided_slice %295 {offsets = [0, 0], sizes = [8, 192], strides = [1, 1]} : vector<8x256xf32> to vector<8x192xf32>
    %298 = arith.negf %297 : vector<8x192xf32>
    %299 = math.exp %298 : vector<8x192xf32>
    %cst_67 = arith.constant 1.000000e+00 : f32
    %300 = vector.broadcast %cst_67 : f32 to vector<8x192xf32>
    %301 = arith.addf %300, %299 : vector<8x192xf32>
    %302 = arith.divf %300, %301 : vector<8x192xf32>
    %303 = vector.extract_strided_slice %295 {offsets = [0, 192], sizes = [8, 64], strides = [1, 1]} : vector<8x256xf32> to vector<8x64xf32>
    %304 = math.tanh %303 : vector<8x64xf32>
    %305 = vector.extract_strided_slice %302 {offsets = [0, 0], sizes = [8, 64], strides = [1, 1]} : vector<8x192xf32> to vector<8x64xf32>
    %306 = vector.extract_strided_slice %302 {offsets = [0, 64], sizes = [8, 64], strides = [1, 1]} : vector<8x192xf32> to vector<8x64xf32>
    %307 = vector.extract_strided_slice %302 {offsets = [0, 128], sizes = [8, 64], strides = [1, 1]} : vector<8x192xf32> to vector<8x64xf32>
    %308 = arith.mulf %306, %267 : vector<8x64xf32>
    %309 = arith.mulf %305, %304 : vector<8x64xf32>
    %310 = arith.addf %308, %309 : vector<8x64xf32>
    %311 = math.tanh %310 : vector<8x64xf32>
    %312 = arith.mulf %307, %311 : vector<8x64xf32>
    %c56 = arith.constant 56 : index
    %c0_68 = arith.constant 0 : index
    %313 = vector.load %arg10[%c56, %c0_68] : memref<64x256xf32, #tpu.memory_space<vmem>>, vector<8x256xf32>
    %314 = arith.addf %313, %296 : vector<8x256xf32>
    %315 = vector.extract_strided_slice %314 {offsets = [0, 0], sizes = [8, 192], strides = [1, 1]} : vector<8x256xf32> to vector<8x192xf32>
    %316 = arith.negf %315 : vector<8x192xf32>
    %317 = math.exp %316 : vector<8x192xf32>
    %cst_69 = arith.constant 1.000000e+00 : f32
    %318 = vector.broadcast %cst_69 : f32 to vector<8x192xf32>
    %319 = arith.addf %318, %317 : vector<8x192xf32>
    %320 = arith.divf %318, %319 : vector<8x192xf32>
    %321 = vector.extract_strided_slice %314 {offsets = [0, 192], sizes = [8, 64], strides = [1, 1]} : vector<8x256xf32> to vector<8x64xf32>
    %322 = math.tanh %321 : vector<8x64xf32>
    %323 = vector.extract_strided_slice %320 {offsets = [0, 0], sizes = [8, 64], strides = [1, 1]} : vector<8x192xf32> to vector<8x64xf32>
    %324 = vector.extract_strided_slice %320 {offsets = [0, 64], sizes = [8, 64], strides = [1, 1]} : vector<8x192xf32> to vector<8x64xf32>
    %325 = vector.extract_strided_slice %320 {offsets = [0, 128], sizes = [8, 64], strides = [1, 1]} : vector<8x192xf32> to vector<8x64xf32>
    %326 = arith.mulf %324, %285 : vector<8x64xf32>
    %327 = arith.mulf %323, %322 : vector<8x64xf32>
    %328 = arith.addf %326, %327 : vector<8x64xf32>
    %329 = math.tanh %328 : vector<8x64xf32>
    %330 = arith.mulf %325, %329 : vector<8x64xf32>
    %331 = tpu.concatenate %330, %312 in 1 : vector<8x64xf32>, vector<8x64xf32> -> vector<8x128xf32>
    %332 = arith.truncf %331 : vector<8x128xf32> to vector<8x128xbf16>
    %c0_70 = arith.constant 0 : index
    %c0_71 = arith.constant 0 : index
    %333 = vector.load %arg3[%c0_70, %c0_71] : memref<128x512xbf16, #tpu.memory_space<vmem>>, vector<128x512xbf16>
    %cst_72 = arith.constant dense<0.000000e+00> : vector<8x512xf32>
    %334 = tpu.matmul %332, %333, %cst_72 {dimension_numbers = #tpu.dot_dimension_numbers<[1], [0], [0], [1], [0, 0, 1, 1], [], []>} : vector<8x128xbf16>, vector<128x512xbf16>, vector<8x512xf32> -> vector<8x512xf32>
    %335 = vector.extract_strided_slice %334 {offsets = [0, 0], sizes = [8, 256], strides = [1, 1]} : vector<8x512xf32> to vector<8x256xf32>
    %c0_73 = arith.constant 0 : index
    %c0_74 = arith.constant 0 : index
    %336 = vector.load %arg4[%c0_73, %c0_74] : memref<1x256xf32, #tpu.memory_space<vmem>>, vector<1x256xf32>
    %337 = vector.broadcast %336 : vector<1x256xf32> to vector<8x256xf32>
    %338 = arith.addf %335, %337 : vector<8x256xf32>
    %339 = vector.extract_strided_slice %338 {offsets = [0, 0], sizes = [8, 192], strides = [1, 1]} : vector<8x256xf32> to vector<8x192xf32>
    %340 = arith.negf %339 : vector<8x192xf32>
    %341 = math.exp %340 : vector<8x192xf32>
    %cst_75 = arith.constant 1.000000e+00 : f32
    %342 = vector.broadcast %cst_75 : f32 to vector<8x192xf32>
    %343 = arith.addf %342, %341 : vector<8x192xf32>
    %344 = arith.divf %342, %343 : vector<8x192xf32>
    %345 = vector.extract_strided_slice %338 {offsets = [0, 192], sizes = [8, 64], strides = [1, 1]} : vector<8x256xf32> to vector<8x64xf32>
    %346 = math.tanh %345 : vector<8x64xf32>
    %347 = vector.extract_strided_slice %344 {offsets = [0, 0], sizes = [8, 64], strides = [1, 1]} : vector<8x192xf32> to vector<8x64xf32>
    %348 = vector.extract_strided_slice %344 {offsets = [0, 64], sizes = [8, 64], strides = [1, 1]} : vector<8x192xf32> to vector<8x64xf32>
    %349 = vector.extract_strided_slice %344 {offsets = [0, 128], sizes = [8, 64], strides = [1, 1]} : vector<8x192xf32> to vector<8x64xf32>
    %350 = arith.mulf %348, %310 : vector<8x64xf32>
    %351 = arith.mulf %347, %346 : vector<8x64xf32>
    %352 = arith.addf %350, %351 : vector<8x64xf32>
    %353 = math.tanh %352 : vector<8x64xf32>
    %354 = arith.mulf %349, %353 : vector<8x64xf32>
    %355 = arith.truncf %354 : vector<8x64xf32> to vector<8x64xbf16>
    %c0_76 = arith.constant 0 : index
    %c0_77 = arith.constant 0 : index
    %356 = vector.load %arg5[%c0_76, %c0_77] : memref<64x32xbf16, #tpu.memory_space<vmem>>, vector<64x32xbf16>
    %cst_78 = arith.constant dense<0.000000e+00> : vector<8x32xf32>
    %357 = tpu.matmul %355, %356, %cst_78 {dimension_numbers = #tpu.dot_dimension_numbers<[1], [0], [0], [1], [0, 0, 1, 1], [], []>} : vector<8x64xbf16>, vector<64x32xbf16>, vector<8x32xf32> -> vector<8x32xf32>
    %c0_79 = arith.constant 0 : index
    %c0_80 = arith.constant 0 : index
    %358 = vector.load %arg6[%c0_79, %c0_80] : memref<1x32xf32, #tpu.memory_space<vmem>>, vector<1x32xf32>
    %359 = vector.broadcast %358 : vector<1x32xf32> to vector<8x32xf32>
    %360 = arith.addf %357, %359 : vector<8x32xf32>
    %cst_81 = arith.constant 0.000000e+00 : f32
    %361 = vector.broadcast %cst_81 : f32 to vector<8x32xf32>
    %362 = arith.maximumf %360, %361 : vector<8x32xf32>
    %363 = arith.truncf %362 : vector<8x32xf32> to vector<8x32xbf16>
    %c0_82 = arith.constant 0 : index
    %c0_83 = arith.constant 0 : index
    %364 = vector.load %arg7[%c0_82, %c0_83] : memref<32x1xbf16, #tpu.memory_space<vmem>>, vector<32x1xbf16>
    %cst_84 = arith.constant dense<0.000000e+00> : vector<8x1xf32>
    %365 = tpu.matmul %363, %364, %cst_84 {dimension_numbers = #tpu.dot_dimension_numbers<[1], [0], [0], [1], [0, 0, 1, 1], [], []>} : vector<8x32xbf16>, vector<32x1xbf16>, vector<8x1xf32> -> vector<8x1xf32>
    %c0_85 = arith.constant 0 : index
    %c0_86 = arith.constant 0 : index
    %366 = vector.load %arg8[%c0_85, %c0_86] : memref<1x1xf32, #tpu.memory_space<vmem>>, vector<1x1xf32>
    %367 = vector.broadcast %366 : vector<1x1xf32> to vector<8x1xf32>
    %368 = arith.addf %365, %367 : vector<8x1xf32>
    %c0_87 = arith.constant 0 : index
    %c0_88 = arith.constant 0 : index
    %369 = vector.load %arg9[%c0_87, %c0_88] : memref<8x1xf32, #tpu.memory_space<vmem>>, vector<8x1xf32>
    tpu.vector_store %arg9[%c0_87, %c0_88], %368 {strides = array<i32>} : memref<8x1xf32, #tpu.memory_space<vmem>>, vector<8x1xf32>,
    return
  }
}

</mosaic_0001>

<llo_original>
// kernel: lstm_power_forward.1
$region0: #{lstm_power_forward.1}
  #allocation0 [shape = 'u32[]', space=smem, size = 0x4, offset = 0x4, fixed_abs, tag = 'smem constant byte address 0x4 - core index']
  #allocation1 [shape = 'u32[144,128]{1,0:T(1,128)}', space=vmem, size = 0x12000, scoped, tag = 'internal scratch']
  #allocation2 [shape = 'f32[64,256]{1,0:T(8,128)}', space=vmem, size = 0x10000, scoped, tag = 'scratch operand']
  #allocation3 [shape = 'f32[1,1]{1,0:T(1,128)S(1)}', space=vmem, size = 0x200, scoped, tag = 'scoped memory for lstm_power_forward.1']
  %s0 = inlined_call_operand.vmem [shape: f32[64,4], index: 0, kind: input, shape index: {}]
  %s1 = inlined_call_operand.vmem [shape: bf16[4,256], index: 1, kind: input, shape index: {}]
  %s2 = inlined_call_operand.vmem [shape: f32[1,256], index: 2, kind: input, shape index: {}]
  %s3 = inlined_call_operand.hbm [shape: bf16[128,512], index: 3, kind: input, shape index: {}]
  %s4 = inlined_call_operand.vmem [shape: f32[1,256], index: 4, kind: input, shape index: {}]
  %s5 = inlined_call_operand.vmem [shape: bf16[64,32], index: 5, kind: input, shape index: {}]
  %s6 = inlined_call_operand.vmem [shape: f32[1,32], index: 6, kind: input, shape index: {}]
  %s7 = inlined_call_operand.vmem [shape: bf16[32,1], index: 7, kind: input, shape index: {}]
  %s8 = inlined_call_operand.<no memory space> [shape: f32[1,1], index: 8, kind: input, shape index: {}]
  %s9 = inlined_call_operand.vmem [shape: f32[8,1], index: 9, kind: output, shape index: {}]
  %s10 = sld [smem:[#allocation0]]
  $region50: #{lstm_power_forward.1} parent=0
    _
  %s12 = ssub.s32 1, %s10
  %s13 = scalar_select 0, %s12, %s10
  %v14 = vstv %s8
  %15 = vst [vmem:[#allocation3] sm:$0x1] %v14
  $region1: #{lstm_power_forward.1} parent=0
    #allocation4 [shape = 'u8[131072]{0}', space=vmem, size = 0x20000, scoped, tag = 'input window, operand 3, single buffered']
    #allocation5 [shape = 's32[1]{0}', space=sflag, size = 0x4, scoped, tag = 'scoped memory for lstm_power_forward.1']
    %16 = vsyncpa [#allocation5], 0
    // Predicated region
    $region2: #{lstm_power_forward.1} parent=1 // pred_check
      _
    $region3: #{lstm_power_forward.1} parent=1 // pred_check_branch
      %18 = sbr.rel (0) target = $region5
    $region4: #{lstm_power_forward.1} parent=1 // pred_region
      _
    $region5: #{lstm_power_forward.1} parent=1 // pred_fallthru
      _
    // Predicated region
    $region6: #{lstm_power_forward.1} parent=1 // pred_check
      _
    $region7: #{lstm_power_forward.1} parent=1 // pred_check_branch
      %20 = sbr.rel (0) target = $region9
    $region8: #{lstm_power_forward.1} parent=1 // pred_region
      _
    $region9: #{lstm_power_forward.1} parent=1 // pred_fallthru
      _
    // Predicated region
    $region10: #{lstm_power_forward.1} parent=1 // pred_check
      _
    $region11: #{lstm_power_forward.1} parent=1 // pred_check_branch
      %22 = sbr.rel (0) target = $region13
    $region12: #{lstm_power_forward.1} parent=1 // pred_region
      _
    $region13: #{lstm_power_forward.1} parent=1 // pred_fallthru
      _
    // Predicated region
    $region14: #{lstm_power_forward.1} parent=1 // pred_check
      _
    $region15: #{lstm_power_forward.1} parent=1 // pred_check_branch
      %24 = sbr.rel (0) target = $region17
    $region16: #{lstm_power_forward.1} parent=1 // pred_region
      %s26 = ssub.s32 4096, 4096
      %27 = vsyncadd [#allocation5], %s26
      %s28 = sshll.u32 [#allocation4], 4
      %s29 = int_to_ptr.vmem [resolvable:$true] %s28
      %34 = dma.hbm_to_vmem [thread:$0]  %s3, 4096, %s29, [#allocation5], 256, 256, 16
    $region17: #{lstm_power_forward.1} parent=1 // pred_fallthru
      _
    // Predicated region
    $region18: #{lstm_power_forward.1} parent=1 // pred_check
      _
    $region19: #{lstm_power_forward.1} parent=1 // pred_check_branch
      %36 = sbr.rel (0) target = $region21
    $region20: #{lstm_power_forward.1} parent=1 // pred_region
      _
    $region21: #{lstm_power_forward.1} parent=1 // pred_fallthru
      _
    // Predicated region
    $region22: #{lstm_power_forward.1} parent=1 // pred_check
      _
    $region23: #{lstm_power_forward.1} parent=1 // pred_check_branch
      %38 = sbr.rel (0) target = $region25
    $region24: #{lstm_power_forward.1} parent=1 // pred_region
      _
    $region25: #{lstm_power_forward.1} parent=1 // pred_fallthru
      _
    // Predicated region
    $region26: #{lstm_power_forward.1} parent=1 // pred_check
      _
    $region27: #{lstm_power_forward.1} parent=1 // pred_check_branch
      %40 = sbr.rel (0) target = $region29
    $region28: #{lstm_power_forward.1} parent=1 // pred_region
      _
    $region29: #{lstm_power_forward.1} parent=1 // pred_fallthru
      _
    // Predicated region
    $region30: #{lstm_power_forward.1} parent=1 // pred_check
      _
    $region31: #{lstm_power_forward.1} parent=1 // pred_check_branch
      %42 = sbr.rel (0) target = $region33
    $region32: #{lstm_power_forward.1} parent=1 // pred_region
      _
    $region33: #{lstm_power_forward.1} parent=1 // pred_fallthru
      _
    // Predicated region
    $region34: #{lstm_power_forward.1} parent=1 // pred_check
      _
    $region35: #{lstm_power_forward.1} parent=1 // pred_check_branch
      %44 = sbr.rel (0) target = $region37
    $region36: #{lstm_power_forward.1} parent=1 // pred_region
      _
    $region37: #{lstm_power_forward.1} parent=1 // pred_fallthru
      _
    // Predicated region
    $region38: #{lstm_power_forward.1} parent=1 // pred_check
      _
    $region39: #{lstm_power_forward.1} parent=1 // pred_check_branch
      %46 = sbr.rel (0) target = $region41
    $region40: #{lstm_power_forward.1} parent=1 // pred_region
      %47 = dma.done [#allocation5], 4096
    $region41: #{lstm_power_forward.1} parent=1 // pred_fallthru
      _
    %v49 = vld [vmem:[%s0] sm:$0xff]
    %v50 = vld [vmem:[%s0 + $0x8] sm:$0xff]
    %v51 = vld [vmem:[%s0 + $0x10] sm:$0xff]
    %v52 = vld [vmem:[%s0 + $0x18] sm:$0xff]
    %v53 = vld [vmem:[%s0 + $0x20] sm:$0xff]
    %v54 = vld [vmem:[%s0 + $0x28] sm:$0xff]
    %v55 = vld [vmem:[%s0 + $0x30] sm:$0xff]
    %v56 = vld [vmem:[%s0 + $0x38] sm:$0xff]
    %v57 = vpack.c.bf16 %v50, %v49
    %v58 = vpack.c.bf16 %v52, %v51
    %v59 = vpack.c.bf16 %v54, %v53
    %v60 = vpack.c.bf16 %v56, %v55
    %v61 = vld [vmem:[%s1] sm:$0xf]
    %v62 = vld [vmem:[%s2] sm:$0x3]
    %v64 = vlaneseq
    %v65 = vshrl.u32 %v64, 7
    %v66 = vsub.s32 0, %v65
    %v67 = vrot.slane %v62, %v66
    %v68 = vlaneseq
    %v69 = vshrl.u32 %v68, 7
    %v70 = vsub.s32 1, %v69
    %v71 = vrot.slane %v62, %v70
    %v76 = vunpack.c.l.s4 1983009808
    %v77 = vunpack.c.0.s8 %v76
    %v78 = vlaneseq
    %v79 = vshrl.u32 %v78, 7
    %v80 = vsub.s32 %v77, %v79
    %v81 = vrot.slane %v61, %v80
    %v82 = vcombine.high %v81, %v81
    %vm83 = vcmask 31744
    %v85 = vsel %vm83, %v57, 0
    %v88 = vsel %vm83, %v58, 0
    %v91 = vsel %vm83, %v59, 0
    %v94 = vsel %vm83, %v60, 0
    %vm96 = vcmask 1041408
    %v98 = vsel %vm96, %v81, 0
    %v101 = vsel %vm96, %v82, 0
    %103 = vmatprep.subr.bf16.mxu0 %v101
    %104 = vmatpush1.bf16.msra.mxu0 %v98
    %105 = vmatprep.subr.bf16.mxu0 0
    %106 = vmatpush1.bf16.msra.mxu0 0
    %107 = vmatprep.subr.bf16.mxu0 0
    %108 = vmatpush1.bf16.msra.mxu0 0
    %109 = vmatprep.subr.bf16.mxu0 0
    %110 = vmatpush1.bf16.msra.mxu0 0
    %111 = vmatprep.subr.bf16.mxu0 0
    %112 = vmatpush1.bf16.msra.mxu0 0
    %113 = vmatprep.subr.bf16.mxu0 0
    %114 = vmatpush1.bf16.msra.mxu0 0
    %115 = vmatprep.subr.bf16.mxu0 0
    %116 = vmatpush1.bf16.msra.mxu0 0
    %117 = vmatprep.subr.bf16.mxu0 0
    %118 = vmatpush1.bf16.msra.mxu0 0
    %119 = vmatprep.subr.bf16.mxu0 0
    %120 = vmatpush1.bf16.msra.mxu0 0
    %121 = vmatprep.subr.bf16.mxu0 0
    %122 = vmatpush1.bf16.msra.mxu0 0
    %123 = vmatprep.subr.bf16.mxu0 0
    %124 = vmatpush1.bf16.msra.mxu0 0
    %125 = vmatprep.subr.bf16.mxu0 0
    %126 = vmatpush1.bf16.msra.mxu0 0
    %127 = vmatprep.subr.bf16.mxu0 0
    %128 = vmatpush1.bf16.msra.mxu0 0
    %129 = vmatprep.subr.bf16.mxu0 0
    %130 = vmatpush1.bf16.msra.mxu0 0
    %131 = vmatprep.subr.bf16.mxu0 0
    %132 = vmatpush1.bf16.msra.mxu0 0
    %133 = vmatprep.subr.bf16.mxu0 0
    %134 = vmatpush1.bf16.msra.mxu0 0
    %135 = vmatprep.mubr.bf16.mxu0 0
    %136 = vmatmul.mubr.bf16.gmra.mrb[0].mxu0 %v85
    %v137 = vpop.f32.mrb[0].mxu0
    %v138 = vadd.f32 %v67, %v137
    %v139 = vpop.f32.mrb[0].mxu0
    %v140 = vadd.f32 %v71, %v139
    %v141 = vpop.f32.mrb[0].mxu0
    %v142 = vadd.f32 %v67, %v141
    %v143 = vpop.f32.mrb[0].mxu0
    %v144 = vadd.f32 %v71, %v143
    %145 = vmatprep.mubr.bf16.mxu0 0
    %146 = vmatmul.mubr.bf16.gmra.mrb[0].mxu0 %v88
    %v147 = vpop.f32.mrb[0].mxu0
    %v148 = vadd.f32 %v67, %v147
    %v149 = vpop.f32.mrb[0].mxu0
    %v150 = vadd.f32 %v71, %v149
    %v151 = vpop.f32.mrb[0].mxu0
    %v152 = vadd.f32 %v67, %v151
    %v153 = vpop.f32.mrb[0].mxu0
    %v154 = vadd.f32 %v71, %v153
    %155 = vmatprep.mubr.bf16.mxu0 0
    %156 = vmatmul.mubr.bf16.gmra.mrb[0].mxu0 %v91
    %v157 = vpop.f32.mrb[0].mxu0
    %v158 = vadd.f32 %v67, %v157
    %v159 = vpop.f32.mrb[0].mxu0
    %v160 = vadd.f32 %v71, %v159
    %v161 = vpop.f32.mrb[0].mxu0
    %v162 = vadd.f32 %v67, %v161
    %v163 = vpop.f32.mrb[0].mxu0
    %v164 = vadd.f32 %v71, %v163
    %165 = vmatprep.mubr.bf16.mxu0 0
    %166 = vmatmul.mubr.bf16.gmra.mrb[0].mxu0 %v94
    %v167 = vpop.f32.mrb[0].mxu0
    %v168 = vadd.f32 %v67, %v167
    %v169 = vpop.f32.mrb[0].mxu0
    %v170 = vadd.f32 %v71, %v169
    %v171 = vpop.f32.mrb[0].mxu0
    %v172 = vadd.f32 %v67, %v171
    %v173 = vpop.f32.mrb[0].mxu0
    %v174 = vadd.f32 %v71, %v173
    %175 = vdwg.mxu0
    %176 = vst [vmem:[#allocation2] sm:$0xff] %v138
    %177 = vst [vmem:[#allocation2 + $0x8] sm:$0xff] %v140
    %178 = vst [vmem:[#allocation2 + $0x10] sm:$0xff] %v142
    %179 = vst [vmem:[#allocation2 + $0x18] sm:$0xff] %v144
    %180 = vst [vmem:[#allocation2 + $0x20] sm:$0xff] %v148
    %181 = vst [vmem:[#allocation2 + $0x28] sm:$0xff] %v150
    %182 = vst [vmem:[#allocation2 + $0x30] sm:$0xff] %v152
    %183 = vst [vmem:[#allocation2 + $0x38] sm:$0xff] %v154
    %184 = vst [vmem:[#allocation2 + $0x40] sm:$0xff] %v158
    %185 = vst [vmem:[#allocation2 + $0x48] sm:$0xff] %v160
    %186 = vst [vmem:[#allocation2 + $0x50] sm:$0xff] %v162
    %187 = vst [vmem:[#allocation2 + $0x58] sm:$0xff] %v164
    %188 = vst [vmem:[#allocation2 + $0x60] sm:$0xff] %v168
    %189 = vst [vmem:[#allocation2 + $0x68] sm:$0xff] %v170
    %190 = vst [vmem:[#allocation2 + $0x70] sm:$0xff] %v172
    %191 = vst [vmem:[#allocation2 + $0x78] sm:$0xff] %v174
    %v192 = vld [vmem:[#allocation2] sm:$0xff]
    %v193 = vld [vmem:[#allocation2 + $0x8] sm:$0xff]
    %v194 = vadd.f32 %v192, 0.0
    %v195 = vadd.f32 %v193, 0.0
    %v196 = vxor.u32 %v194, 2147483648
    %v197 = vxor.u32 %v195, 2147483648
    %v198 = vmul.f32 %v196, 1.442695
    %v199 = vpow.pop %v198
    %v200 = vmul.f32 %v197, 1.442695
    %v201 = vpow.pop %v200
    %v202 = vadd.f32 %v199, 1.0
    %v203 = vadd.f32 %v201, 1.0
    %v204 = vrcp.pop %v202
    %v205 = vmul.f32 1.0, %v204
    %v206 = vrcp.pop %v203
    %v207 = vmul.f32 1.0, %v206
    %v208 = vtanh.pop %v195
    %v209 = vmul.f32 %v205, 0.0
    %211 = vrot.lane.b32.xlu0 %v208, 64
    %v212 = vpop.permute.xlu0 %211
    %v214 = vmul.f32 %v205, %v212
    %216 = vrot.lane.b32.xlu0 %v214, 64
    %v217 = vpop.permute.xlu0 %216
    %v219 = vadd.f32 %v209, %v217
    %v220 = vtanh.pop %v219
    %222 = vrot.lane.b32.xlu0 %v220, 64
    %v223 = vpop.permute.xlu0 %222
    %v225 = vmul.f32 %v207, %v223
    %vm226 = vcmask 523264
    %v227 = vsel %vm226, %v225, 0.0
    %v228 = vpack.c.bf16 %v227, %v227
    %v229 = vld [vmem:[#allocation4] sm:$0xff]
    %v230 = vld [vmem:[#allocation4 + $0x8] sm:$0xff]
    %v231 = vld [vmem:[#allocation4 + $0x10] sm:$0xff]
    %v232 = vld [vmem:[#allocation4 + $0x18] sm:$0xff]
    %v233 = vld [vmem:[#allocation4 + $0x20] sm:$0xff]
    %v234 = vld [vmem:[#allocation4 + $0x28] sm:$0xff]
    %v235 = vld [vmem:[#allocation4 + $0x30] sm:$0xff]
    %v236 = vld [vmem:[#allocation4 + $0x38] sm:$0xff]
    %v237 = vld [vmem:[#allocation4 + $0x40] sm:$0xff]
    %v238 = vld [vmem:[#allocation4 + $0x48] sm:$0xff]
    %v239 = vld [vmem:[#allocation4 + $0x50] sm:$0xff]
    %v240 = vld [vmem:[#allocation4 + $0x58] sm:$0xff]
    %v241 = vld [vmem:[#allocation4 + $0x60] sm:$0xff]
    %v242 = vld [vmem:[#allocation4 + $0x68] sm:$0xff]
    %v243 = vld [vmem:[#allocation4 + $0x70] sm:$0xff]
    %v244 = vld [vmem:[#allocation4 + $0x78] sm:$0xff]
    %v245 = vld [vmem:[#allocation4 + $0x80] sm:$0xff]
    %v246 = vld [vmem:[#allocation4 + $0x88] sm:$0xff]
    %v247 = vld [vmem:[#allocation4 + $0x90] sm:$0xff]
    %v248 = vld [vmem:[#allocation4 + $0x98] sm:$0xff]
    %v249 = vld [vmem:[#allocation4 + $0xa0] sm:$0xff]
    %v250 = vld [vmem:[#allocation4 + $0xa8] sm:$0xff]
    %v251 = vld [vmem:[#allocation4 + $0xb0] sm:$0xff]
    %v252 = vld [vmem:[#allocation4 + $0xb8] sm:$0xff]
    %v253 = vld [vmem:[#allocation4 + $0xc0] sm:$0xff]
    %v254 = vld [vmem:[#allocation4 + $0xc8] sm:$0xff]
    %v255 = vld [vmem:[#allocation4 + $0xd0] sm:$0xff]
    %v256 = vld [vmem:[#allocation4 + $0xd8] sm:$0xff]
    %v257 = vld [vmem:[#allocation4 + $0xe0] sm:$0xff]
    %v258 = vld [vmem:[#allocation4 + $0xe8] sm:$0xff]
    %v259 = vld [vmem:[#allocation4 + $0xf0] sm:$0xff]
    %v260 = vld [vmem:[#allocation4 + $0xf8] sm:$0xff]
    %v293 = vunpack.c.l.b16 %v229
    %v294 = vunpack.c.h.b16 %v229
    %v295 = vunpack.c.l.b16 %v230
    %v296 = vunpack.c.h.b16 %v230
    %v297 = vunpack.c.l.b16 %v231
    %v298 = vunpack.c.h.b16 %v231
    %v299 = vunpack.c.l.b16 %v232
    %v300 = vunpack.c.h.b16 %v232
    %v301 = vunpack.c.l.b16 %v233
    %v302 = vunpack.c.h.b16 %v233
    %v303 = vunpack.c.l.b16 %v234
    %v304 = vunpack.c.h.b16 %v234
    %v305 = vunpack.c.l.b16 %v235
    %v306 = vunpack.c.h.b16 %v235
    %v307 = vunpack.c.l.b16 %v236
    %v308 = vunpack.c.h.b16 %v236
    %v309 = vunpack.c.l.b16 %v237
    %v310 = vunpack.c.h.b16 %v237
    %v311 = vunpack.c.l.b16 %v238
    %v312 = vunpack.c.h.b16 %v238
    %v313 = vunpack.c.l.b16 %v239
    %v314 = vunpack.c.h.b16 %v239
    %v315 = vunpack.c.l.b16 %v240
    %v316 = vunpack.c.h.b16 %v240
    %v317 = vunpack.c.l.b16 %v241
    %v318 = vunpack.c.h.b16 %v241
    %v319 = vunpack.c.l.b16 %v242
    %v320 = vunpack.c.h.b16 %v242
    %v321 = vunpack.c.l.b16 %v243
    %v322 = vunpack.c.h.b16 %v243
    %v323 = vunpack.c.l.b16 %v244
    %v324 = vunpack.c.h.b16 %v244
    %v325 = vunpack.c.l.b16 %v245
    %v326 = vunpack.c.h.b16 %v245
    %v327 = vunpack.c.l.b16 %v246
    %v328 = vunpack.c.h.b16 %v246
    %v329 = vunpack.c.l.b16 %v247
    %v330 = vunpack.c.h.b16 %v247
    %v331 = vunpack.c.l.b16 %v248
    %v332 = vunpack.c.h.b16 %v248
    %v333 = vunpack.c.l.b16 %v249
    %v334 = vunpack.c.h.b16 %v249
    %v335 = vunpack.c.l.b16 %v250
    %v336 = vunpack.c.h.b16 %v250
    %v337 = vunpack.c.l.b16 %v251
    %v338 = vunpack.c.h.b16 %v251
    %v339 = vunpack.c.l.b16 %v252
    %v340 = vunpack.c.h.b16 %v252
    %v341 = vunpack.c.l.b16 %v253
    %v342 = vunpack.c.h.b16 %v253
    %v343 = vunpack.c.l.b16 %v254
    %v344 = vunpack.c.h.b16 %v254
    %v345 = vunpack.c.l.b16 %v255
    %v346 = vunpack.c.h.b16 %v255
    %v347 = vunpack.c.l.b16 %v256
    %v348 = vunpack.c.h.b16 %v256
    %v349 = vunpack.c.l.b16 %v257
    %v350 = vunpack.c.h.b16 %v257
    %v351 = vunpack.c.l.b16 %v258
    %v352 = vunpack.c.h.b16 %v258
    %v353 = vunpack.c.l.b16 %v259
    %v354 = vunpack.c.h.b16 %v259
    %v355 = vunpack.c.l.b16 %v260
    %v356 = vunpack.c.h.b16 %v260
    %v357 = vpack.c.b16 %v297, %v293
    %v358 = vpack.c.b16 %v298, %v294
    %v359 = vpack.c.b16 %v299, %v295
    %v360 = vpack.c.b16 %v300, %v296
    %v361 = vpack.c.b16 %v305, %v301
    %v362 = vpack.c.b16 %v306, %v302
    %v363 = vpack.c.b16 %v307, %v303
    %v364 = vpack.c.b16 %v308, %v304
    %v365 = vpack.c.b16 %v313, %v309
    %v366 = vpack.c.b16 %v314, %v310
    %v367 = vpack.c.b16 %v315, %v311
    %v368 = vpack.c.b16 %v316, %v312
    %v369 = vpack.c.b16 %v321, %v317
    %v370 = vpack.c.b16 %v322, %v318
    %v371 = vpack.c.b16 %v323, %v319
    %v372 = vpack.c.b16 %v324, %v320
    %v373 = vpack.c.b16 %v329, %v325
    %v374 = vpack.c.b16 %v330, %v326
    %v375 = vpack.c.b16 %v331, %v327
    %v376 = vpack.c.b16 %v332, %v328
    %v377 = vpack.c.b16 %v337, %v333
    %v378 = vpack.c.b16 %v338, %v334
    %v379 = vpack.c.b16 %v339, %v335
    %v380 = vpack.c.b16 %v340, %v336
    %v381 = vpack.c.b16 %v345, %v341
    %v382 = vpack.c.b16 %v346, %v342
    %v383 = vpack.c.b16 %v347, %v343
    %v384 = vpack.c.b16 %v348, %v344
    %v385 = vpack.c.b16 %v353, %v349
    %v386 = vpack.c.b16 %v354, %v350
    %v387 = vpack.c.b16 %v355, %v351
    %v388 = vpack.c.b16 %v356, %v352
    %421 = vmatprep.subr.bf16.mxu0 %v358
    %422 = vmatpush1.bf16.msra.mxu0 %v357
    %423 = vmatprep.subr.bf16.mxu0 %v362
    %424 = vmatpush1.bf16.msra.mxu0 %v361
    %425 = vmatprep.subr.bf16.mxu0 %v366
    %426 = vmatpush1.bf16.msra.mxu0 %v365
    %427 = vmatprep.subr.bf16.mxu0 %v370
    %428 = vmatpush1.bf16.msra.mxu0 %v369
    %429 = vmatprep.subr.bf16.mxu0 %v374
    %430 = vmatpush1.bf16.msra.mxu0 %v373
    %431 = vmatprep.subr.bf16.mxu0 %v378
    %432 = vmatpush1.bf16.msra.mxu0 %v377
    %433 = vmatprep.subr.bf16.mxu0 %v382
    %434 = vmatpush1.bf16.msra.mxu0 %v381
    %435 = vmatprep.subr.bf16.mxu0 %v386
    %436 = vmatpush1.bf16.msra.mxu0 %v385
    %437 = vmatprep.subr.bf16.mxu0 0
    %438 = vmatpush1.bf16.msra.mxu0 0
    %439 = vmatprep.subr.bf16.mxu0 0
    %440 = vmatpush1.bf16.msra.mxu0 0
    %441 = vmatprep.subr.bf16.mxu0 0
    %442 = vmatpush1.bf16.msra.mxu0 0
    %443 = vmatprep.subr.bf16.mxu0 0
    %444 = vmatpush1.bf16.msra.mxu0 0
    %445 = vmatprep.subr.bf16.mxu0 0
    %446 = vmatpush1.bf16.msra.mxu0 0
    %447 = vmatprep.subr.bf16.mxu0 0
    %448 = vmatpush1.bf16.msra.mxu0 0
    %449 = vmatprep.subr.bf16.mxu0 0
    %450 = vmatpush1.bf16.msra.mxu0 0
    %451 = vmatprep.subr.bf16.mxu0 0
    %452 = vmatpush1.bf16.msra.mxu0 0
    %453 = vmatprep.mubr.bf16.mxu0 0
    %454 = vmatmul.mubr.bf16.gmra.mrb[0].mxu0 %v228
    %v455 = vpop.f32.mrb[0].mxu0
    %v456 = vadd.f32 0.0, %v455
    %v457 = vpop.f32.mrb[0].mxu0
    %v458 = vadd.f32 0.0, %v457
    %v459 = vpop.f32.mrb[0].mxu0
    %v460 = vpop.f32.mrb[0].mxu0
    %461 = vdwg.mxu0
    %462 = vmatprep.subr.bf16.mxu0 %v360
    %463 = vmatpush1.bf16.msra.mxu0 %v359
    %464 = vmatprep.subr.bf16.mxu0 %v364
    %465 = vmatpush1.bf16.msra.mxu0 %v363
    %466 = vmatprep.subr.bf16.mxu0 %v368
    %467 = vmatpush1.bf16.msra.mxu0 %v367
    %468 = vmatprep.subr.bf16.mxu0 %v372
    %469 = vmatpush1.bf16.msra.mxu0 %v371
    %470 = vmatprep.subr.bf16.mxu0 %v376
    %471 = vmatpush1.bf16.msra.mxu0 %v375
    %472 = vmatprep.subr.bf16.mxu0 %v380
    %473 = vmatpush1.bf16.msra.mxu0 %v379
    %474 = vmatprep.subr.bf16.mxu0 %v384
    %475 = vmatpush1.bf16.msra.mxu0 %v383
    %476 = vmatprep.subr.bf16.mxu0 %v388
    %477 = vmatpush1.bf16.msra.mxu0 %v387
    %478 = vmatprep.subr.bf16.mxu0 0
    %479 = vmatpush1.bf16.msra.mxu0 0
    %480 = vmatprep.subr.bf16.mxu0 0
    %481 = vmatpush1.bf16.msra.mxu0 0
    %482 = vmatprep.subr.bf16.mxu0 0
    %483 = vmatpush1.bf16.msra.mxu0 0
    %484 = vmatprep.subr.bf16.mxu0 0
    %485 = vmatpush1.bf16.msra.mxu0 0
    %486 = vmatprep.subr.bf16.mxu0 0
    %487 = vmatpush1.bf16.msra.mxu0 0
    %488 = vmatprep.subr.bf16.mxu0 0
    %489 = vmatpush1.bf16.msra.mxu0 0
    %490 = vmatprep.subr.bf16.mxu0 0
    %491 = vmatpush1.bf16.msra.mxu0 0
    %492 = vmatprep.subr.bf16.mxu0 0
    %493 = vmatpush1.bf16.msra.mxu0 0
    %494 = vmatprep.mubr.bf16.mxu0 0
    %495 = vmatmul.mubr.bf16.gmra.mrb[0].mxu0 %v228
    %v496 = vpop.f32.mrb[0].mxu0
    %v497 = vadd.f32 0.0, %v496
    %v498 = vpop.f32.mrb[0].mxu0
    %v499 = vadd.f32 0.0, %v498
    %v500 = vpop.f32.mrb[0].mxu0
    %v501 = vpop.f32.mrb[0].mxu0
    %502 = vdwg.mxu0
    %v503 = vld [vmem:[%s4] sm:$0x3]
    %v505 = vlaneseq
    %v506 = vshrl.u32 %v505, 7
    %v507 = vsub.s32 0, %v506
    %v508 = vrot.slane %v503, %v507
    %v509 = vlaneseq
    %v510 = vshrl.u32 %v509, 7
    %v511 = vsub.s32 1, %v510
    %v512 = vrot.slane %v503, %v511
    %v515 = vadd.f32 %v456, %v508
    %v516 = vadd.f32 %v458, %v512
    %v517 = vxor.u32 %v515, 2147483648
    %v518 = vxor.u32 %v516, 2147483648
    %v519 = vmul.f32 %v517, 1.442695
    %v520 = vpow.pop %v519
    %v521 = vmul.f32 %v518, 1.442695
    %v522 = vpow.pop %v521
    %v523 = vadd.f32 %v520, 1.0
    %v524 = vadd.f32 %v522, 1.0
    %v525 = vrcp.pop %v523
    %v526 = vmul.f32 1.0, %v525
    %v527 = vrcp.pop %v524
    %v528 = vmul.f32 1.0, %v527
    %v529 = vtanh.pop %v516
    %v530 = vmul.f32 %v526, 0.0
    %532 = vrot.lane.b32.xlu0 %v529, 64
    %v533 = vpop.permute.xlu0 %532
    %v535 = vmul.f32 %v526, %v533
    %537 = vrot.lane.b32.xlu0 %v535, 64
    %v538 = vpop.permute.xlu0 %537
    %v540 = vadd.f32 %v530, %v538
    %v541 = vtanh.pop %v540
    %543 = vrot.lane.b32.xlu0 %v541, 64
    %v544 = vpop.permute.xlu0 %543
    %v546 = vmul.f32 %v528, %v544
    %v547 = vld [vmem:[#allocation2 + $0x10] sm:$0xff]
    %v548 = vld [vmem:[#allocation2 + $0x18] sm:$0xff]
    %v549 = vadd.f32 %v547, %v497
    %v550 = vadd.f32 %v548, %v499
    %v551 = vxor.u32 %v549, 2147483648
    %v552 = vxor.u32 %v550, 2147483648
    %v553 = vmul.f32 %v551, 1.442695
    %v554 = vpow.pop %v553
    %v555 = vmul.f32 %v552, 1.442695
    %v556 = vpow.pop %v555
    %v557 = vadd.f32 %v554, 1.0
    %v558 = vadd.f32 %v556, 1.0
    %v559 = vrcp.pop %v557
    %v560 = vmul.f32 1.0, %v559
    %v561 = vrcp.pop %v558
    %v562 = vmul.f32 1.0, %v561
    %v563 = vtanh.pop %v550
    %v564 = vmul.f32 %v560, %v219
    %566 = vrot.lane.b32.xlu0 %v563, 64
    %v567 = vpop.permute.xlu0 %566
    %v569 = vmul.f32 %v560, %v567
    %571 = vrot.lane.b32.xlu0 %v569, 64
    %v572 = vpop.permute.xlu0 %571
    %v574 = vadd.f32 %v564, %v572
    %v575 = vtanh.pop %v574
    %577 = vrot.lane.b32.xlu0 %v575, 64
    %v578 = vpop.permute.xlu0 %577
    %v580 = vmul.f32 %v562, %v578
    %582 = vrot.lane.b32.xlu0 %v546, 64
    %v583 = vpop.permute.xlu0 %582
    %v585 = vsel %vm226, %v580, %v583
    %v586 = vpack.c.bf16 %v585, %v585
    %587 = vmatprep.subr.bf16.mxu0 %v358
    %588 = vmatpush1.bf16.msra.mxu0 %v357
    %589 = vmatprep.subr.bf16.mxu0 %v362
    %590 = vmatpush1.bf16.msra.mxu0 %v361
    %591 = vmatprep.subr.bf16.mxu0 %v366
    %592 = vmatpush1.bf16.msra.mxu0 %v365
    %593 = vmatprep.subr.bf16.mxu0 %v370
    %594 = vmatpush1.bf16.msra.mxu0 %v369
    %595 = vmatprep.subr.bf16.mxu0 %v374
    %596 = vmatpush1.bf16.msra.mxu0 %v373
    %597 = vmatprep.subr.bf16.mxu0 %v378
    %598 = vmatpush1.bf16.msra.mxu0 %v377
    %599 = vmatprep.subr.bf16.mxu0 %v382
    %600 = vmatpush1.bf16.msra.mxu0 %v381
    %601 = vmatprep.subr.bf16.mxu0 %v386
    %602 = vmatpush1.bf16.msra.mxu0 %v385
    %603 = vmatprep.subr.bf16.mxu0 0
    %604 = vmatpush1.bf16.msra.mxu0 0
    %605 = vmatprep.subr.bf16.mxu0 0
    %606 = vmatpush1.bf16.msra.mxu0 0
    %607 = vmatprep.subr.bf16.mxu0 0
    %608 = vmatpush1.bf16.msra.mxu0 0
    %609 = vmatprep.subr.bf16.mxu0 0
    %610 = vmatpush1.bf16.msra.mxu0 0
    %611 = vmatprep.subr.bf16.mxu0 0
    %612 = vmatpush1.bf16.msra.mxu0 0
    %613 = vmatprep.subr.bf16.mxu0 0
    %614 = vmatpush1.bf16.msra.mxu0 0
    %615 = vmatprep.subr.bf16.mxu0 0
    %616 = vmatpush1.bf16.msra.mxu0 0
    %617 = vmatprep.subr.bf16.mxu0 0
    %618 = vmatpush1.bf16.msra.mxu0 0
    %619 = vmatprep.mubr.bf16.mxu0 0
    %620 = vmatmul.mubr.bf16.gmra.mrb[0].mxu0 %v586
    %v621 = vpop.f32.mrb[0].mxu0
    %v622 = vadd.f32 0.0, %v621
    %v623 = vpop.f32.mrb[0].mxu0
    %v624 = vadd.f32 0.0, %v623
    %v625 = vpop.f32.mrb[0].mxu0
    %v626 = vpop.f32.mrb[0].mxu0
    %627 = vdwg.mxu0
    %628 = vmatprep.subr.bf16.mxu0 %v360
    %629 = vmatpush1.bf16.msra.mxu0 %v359
    %630 = vmatprep.subr.bf16.mxu0 %v364
    %631 = vmatpush1.bf16.msra.mxu0 %v363
    %632 = vmatprep.subr.bf16.mxu0 %v368
    %633 = vmatpush1.bf16.msra.mxu0 %v367
    %634 = vmatprep.subr.bf16.mxu0 %v372
    %635 = vmatpush1.bf16.msra.mxu0 %v371
    %636 = vmatprep.subr.bf16.mxu0 %v376
    %637 = vmatpush1.bf16.msra.mxu0 %v375
    %638 = vmatprep.subr.bf16.mxu0 %v380
    %639 = vmatpush1.bf16.msra.mxu0 %v379
    %640 = vmatprep.subr.bf16.mxu0 %v384
    %641 = vmatpush1.bf16.msra.mxu0 %v383
    %642 = vmatprep.subr.bf16.mxu0 %v388
    %643 = vmatpush1.bf16.msra.mxu0 %v387
    %644 = vmatprep.subr.bf16.mxu0 0
    %645 = vmatpush1.bf16.msra.mxu0 0
    %646 = vmatprep.subr.bf16.mxu0 0
    %647 = vmatpush1.bf16.msra.mxu0 0
    %648 = vmatprep.subr.bf16.mxu0 0
    %649 = vmatpush1.bf16.msra.mxu0 0
    %650 = vmatprep.subr.bf16.mxu0 0
    %651 = vmatpush1.bf16.msra.mxu0 0
    %652 = vmatprep.subr.bf16.mxu0 0
    %653 = vmatpush1.bf16.msra.mxu0 0
    %654 = vmatprep.subr.bf16.mxu0 0
    %655 = vmatpush1.bf16.msra.mxu0 0
    %656 = vmatprep.subr.bf16.mxu0 0
    %657 = vmatpush1.bf16.msra.mxu0 0
    %658 = vmatprep.subr.bf16.mxu0 0
    %659 = vmatpush1.bf16.msra.mxu0 0
    %660 = vmatprep.mubr.bf16.mxu0 0
    %661 = vmatmul.mubr.bf16.gmra.mrb[0].mxu0 %v586
    %v662 = vpop.f32.mrb[0].mxu0
    %v663 = vadd.f32 0.0, %v662
    %v664 = vpop.f32.mrb[0].mxu0
    %v665 = vadd.f32 0.0, %v664
    %v666 = vpop.f32.mrb[0].mxu0
    %v667 = vpop.f32.mrb[0].mxu0
    %668 = vdwg.mxu0
    %v669 = vadd.f32 %v622, %v508
    %v670 = vadd.f32 %v624, %v512
    %v671 = vxor.u32 %v669, 2147483648
    %v672 = vxor.u32 %v670, 2147483648
    %v673 = vmul.f32 %v671, 1.442695
    %v674 = vpow.pop %v673
    %v675 = vmul.f32 %v672, 1.442695
    %v676 = vpow.pop %v675
    %v677 = vadd.f32 %v674, 1.0
    %v678 = vadd.f32 %v676, 1.0
    %v679 = vrcp.pop %v677
    %v680 = vmul.f32 1.0, %v679
    %v681 = vrcp.pop %v678
    %v682 = vmul.f32 1.0, %v681
    %v683 = vtanh.pop %v670
    %v684 = vmul.f32 %v680, %v540
    %686 = vrot.lane.b32.xlu0 %v683, 64
    %v687 = vpop.permute.xlu0 %686
    %v689 = vmul.f32 %v680, %v687
    %691 = vrot.lane.b32.xlu0 %v689, 64
    %v692 = vpop.permute.xlu0 %691
    %v694 = vadd.f32 %v684, %v692
    %v695 = vtanh.pop %v694
    %697 = vrot.lane.b32.xlu0 %v695, 64
    %v698 = vpop.permute.xlu0 %697
    %v700 = vmul.f32 %v682, %v698
    %v701 = vld [vmem:[#allocation2 + $0x20] sm:$0xff]
    %v702 = vld [vmem:[#allocation2 + $0x28] sm:$0xff]
    %v703 = vadd.f32 %v701, %v663
    %v704 = vadd.f32 %v702, %v665
    %v705 = vxor.u32 %v703, 2147483648
    %v706 = vxor.u32 %v704, 2147483648
    %v707 = vmul.f32 %v705, 1.442695
    %v708 = vpow.pop %v707
    %v709 = vmul.f32 %v706, 1.442695
    %v710 = vpow.pop %v709
    %v711 = vadd.f32 %v708, 1.0
    %v712 = vadd.f32 %v710, 1.0
    %v713 = vrcp.pop %v711
    %v714 = vmul.f32 1.0, %v713
    %v715 = vrcp.pop %v712
    %v716 = vmul.f32 1.0, %v715
    %v717 = vtanh.pop %v704
    %v718 = vmul.f32 %v714, %v574
    %720 = vrot.lane.b32.xlu0 %v717, 64
    %v721 = vpop.permute.xlu0 %720
    %v723 = vmul.f32 %v714, %v721
    %725 = vrot.lane.b32.xlu0 %v723, 64
    %v726 = vpop.permute.xlu0 %725
    %v728 = vadd.f32 %v718, %v726
    %v729 = vtanh.pop %v728
    %731 = vrot.lane.b32.xlu0 %v729, 64
    %v732 = vpop.permute.xlu0 %731
    %v734 = vmul.f32 %v716, %v732
    %736 = vrot.lane.b32.xlu0 %v700, 64
    %v737 = vpop.permute.xlu0 %736
    %v739 = vsel %vm226, %v734, %v737
    %v740 = vpack.c.bf16 %v739, %v739
    %741 = vmatprep.subr.bf16.mxu0 %v358
    %742 = vmatpush1.bf16.msra.mxu0 %v357
    %743 = vmatprep.subr.bf16.mxu0 %v362
    %744 = vmatpush1.bf16.msra.mxu0 %v361
    %745 = vmatprep.subr.bf16.mxu0 %v366
    %746 = vmatpush1.bf16.msra.mxu0 %v365
    %747 = vmatprep.subr.bf16.mxu0 %v370
    %748 = vmatpush1.bf16.msra.mxu0 %v369
    %749 = vmatprep.subr.bf16.mxu0 %v374
    %750 = vmatpush1.bf16.msra.mxu0 %v373
    %751 = vmatprep.subr.bf16.mxu0 %v378
    %752 = vmatpush1.bf16.msra.mxu0 %v377
    %753 = vmatprep.subr.bf16.mxu0 %v382
    %754 = vmatpush1.bf16.msra.mxu0 %v381
    %755 = vmatprep.subr.bf16.mxu0 %v386
    %756 = vmatpush1.bf16.msra.mxu0 %v385
    %757 = vmatprep.subr.bf16.mxu0 0
    %758 = vmatpush1.bf16.msra.mxu0 0
    %759 = vmatprep.subr.bf16.mxu0 0
    %760 = vmatpush1.bf16.msra.mxu0 0
    %761 = vmatprep.subr.bf16.mxu0 0
    %762 = vmatpush1.bf16.msra.mxu0 0
    %763 = vmatprep.subr.bf16.mxu0 0
    %764 = vmatpush1.bf16.msra.mxu0 0
    %765 = vmatprep.subr.bf16.mxu0 0
    %766 = vmatpush1.bf16.msra.mxu0 0
    %767 = vmatprep.subr.bf16.mxu0 0
    %768 = vmatpush1.bf16.msra.mxu0 0
    %769 = vmatprep.subr.bf16.mxu0 0
    %770 = vmatpush1.bf16.msra.mxu0 0
    %771 = vmatprep.subr.bf16.mxu0 0
    %772 = vmatpush1.bf16.msra.mxu0 0
    %773 = vmatprep.mubr.bf16.mxu0 0
    %774 = vmatmul.mubr.bf16.gmra.mrb[0].mxu0 %v740
    %v775 = vpop.f32.mrb[0].mxu0
    %v776 = vadd.f32 0.0, %v775
    %v777 = vpop.f32.mrb[0].mxu0
    %v778 = vadd.f32 0.0, %v777
    %v779 = vpop.f32.mrb[0].mxu0
    %v780 = vpop.f32.mrb[0].mxu0
    %781 = vdwg.mxu0
    %782 = vmatprep.subr.bf16.mxu0 %v360
    %783 = vmatpush1.bf16.msra.mxu0 %v359
    %784 = vmatprep.subr.bf16.mxu0 %v364
    %785 = vmatpush1.bf16.msra.mxu0 %v363
    %786 = vmatprep.subr.bf16.mxu0 %v368
    %787 = vmatpush1.bf16.msra.mxu0 %v367
    %788 = vmatprep.subr.bf16.mxu0 %v372
    %789 = vmatpush1.bf16.msra.mxu0 %v371
    %790 = vmatprep.subr.bf16.mxu0 %v376
    %791 = vmatpush1.bf16.msra.mxu0 %v375
    %792 = vmatprep.subr.bf16.mxu0 %v380
    %793 = vmatpush1.bf16.msra.mxu0 %v379
    %794 = vmatprep.subr.bf16.mxu0 %v384
    %795 = vmatpush1.bf16.msra.mxu0 %v383
    %796 = vmatprep.subr.bf16.mxu0 %v388
    %797 = vmatpush1.bf16.msra.mxu0 %v387
    %798 = vmatprep.subr.bf16.mxu0 0
    %799 = vmatpush1.bf16.msra.mxu0 0
    %800 = vmatprep.subr.bf16.mxu0 0
    %801 = vmatpush1.bf16.msra.mxu0 0
    %802 = vmatprep.subr.bf16.mxu0 0
    %803 = vmatpush1.bf16.msra.mxu0 0
    %804 = vmatprep.subr.bf16.mxu0 0
    %805 = vmatpush1.bf16.msra.mxu0 0
    %806 = vmatprep.subr.bf16.mxu0 0
    %807 = vmatpush1.bf16.msra.mxu0 0
    %808 = vmatprep.subr.bf16.mxu0 0
    %809 = vmatpush1.bf16.msra.mxu0 0
    %810 = vmatprep.subr.bf16.mxu0 0
    %811 = vmatpush1.bf16.msra.mxu0 0
    %812 = vmatprep.subr.bf16.mxu0 0
    %813 = vmatpush1.bf16.msra.mxu0 0
    %814 = vmatprep.mubr.bf16.mxu0 0
    %815 = vmatmul.mubr.bf16.gmra.mrb[0].mxu0 %v740
    %v816 = vpop.f32.mrb[0].mxu0
    %v817 = vadd.f32 0.0, %v816
    %v818 = vpop.f32.mrb[0].mxu0
    %v819 = vadd.f32 0.0, %v818
    %v820 = vpop.f32.mrb[0].mxu0
    %v821 = vpop.f32.mrb[0].mxu0
    %822 = vdwg.mxu0
    %v823 = vadd.f32 %v776, %v508
    %v824 = vadd.f32 %v778, %v512
    %v825 = vxor.u32 %v823, 2147483648
    %v826 = vxor.u32 %v824, 2147483648
    %v827 = vmul.f32 %v825, 1.442695
    %v828 = vpow.pop %v827
    %v829 = vmul.f32 %v826, 1.442695
    %v830 = vpow.pop %v829
    %v831 = vadd.f32 %v828, 1.0
    %v832 = vadd.f32 %v830, 1.0
    %v833 = vrcp.pop %v831
    %v834 = vmul.f32 1.0, %v833
    %v835 = vrcp.pop %v832
    %v836 = vmul.f32 1.0, %v835
    %v837 = vtanh.pop %v824
    %v838 = vmul.f32 %v834, %v694
    %840 = vrot.lane.b32.xlu0 %v837, 64
    %v841 = vpop.permute.xlu0 %840
    %v843 = vmul.f32 %v834, %v841
    %845 = vrot.lane.b32.xlu0 %v843, 64
    %v846 = vpop.permute.xlu0 %845
    %v848 = vadd.f32 %v838, %v846
    %v849 = vtanh.pop %v848
    %851 = vrot.lane.b32.xlu0 %v849, 64
    %v852 = vpop.permute.xlu0 %851
    %v854 = vmul.f32 %v836, %v852
    %v855 = vld [vmem:[#allocation2 + $0x30] sm:$0xff]
    %v856 = vld [vmem:[#allocation2 + $0x38] sm:$0xff]
    %v857 = vadd.f32 %v855, %v817
    %v858 = vadd.f32 %v856, %v819
    %v859 = vxor.u32 %v857, 2147483648
    %v860 = vxor.u32 %v858, 2147483648
    %v861 = vmul.f32 %v859, 1.442695
    %v862 = vpow.pop %v861
    %v863 = vmul.f32 %v860, 1.442695
    %v864 = vpow.pop %v863
    %v865 = vadd.f32 %v862, 1.0
    %v866 = vadd.f32 %v864, 1.0
    %v867 = vrcp.pop %v865
    %v868 = vmul.f32 1.0, %v867
    %v869 = vrcp.pop %v866
    %v870 = vmul.f32 1.0, %v869
    %v871 = vtanh.pop %v858
    %v872 = vmul.f32 %v868, %v728
    %874 = vrot.lane.b32.xlu0 %v871, 64
    %v875 = vpop.permute.xlu0 %874
    %v877 = vmul.f32 %v868, %v875
    %879 = vrot.lane.b32.xlu0 %v877, 64
    %v880 = vpop.permute.xlu0 %879
    %v882 = vadd.f32 %v872, %v880
    %v883 = vtanh.pop %v882
    %885 = vrot.lane.b32.xlu0 %v883, 64
    %v886 = vpop.permute.xlu0 %885
    %v888 = vmul.f32 %v870, %v886
    %890 = vrot.lane.b32.xlu0 %v854, 64
    %v891 = vpop.permute.xlu0 %890
    %v893 = vsel %vm226, %v888, %v891
    %v894 = vpack.c.bf16 %v893, %v893
    %895 = vmatprep.subr.bf16.mxu0 %v358
    %896 = vmatpush1.bf16.msra.mxu0 %v357
    %897 = vmatprep.subr.bf16.mxu0 %v362
    %898 = vmatpush1.bf16.msra.mxu0 %v361
    %899 = vmatprep.subr.bf16.mxu0 %v366
    %900 = vmatpush1.bf16.msra.mxu0 %v365
    %901 = vmatprep.subr.bf16.mxu0 %v370
    %902 = vmatpush1.bf16.msra.mxu0 %v369
    %903 = vmatprep.subr.bf16.mxu0 %v374
    %904 = vmatpush1.bf16.msra.mxu0 %v373
    %905 = vmatprep.subr.bf16.mxu0 %v378
    %906 = vmatpush1.bf16.msra.mxu0 %v377
    %907 = vmatprep.subr.bf16.mxu0 %v382
    %908 = vmatpush1.bf16.msra.mxu0 %v381
    %909 = vmatprep.subr.bf16.mxu0 %v386
    %910 = vmatpush1.bf16.msra.mxu0 %v385
    %911 = vmatprep.subr.bf16.mxu0 0
    %912 = vmatpush1.bf16.msra.mxu0 0
    %913 = vmatprep.subr.bf16.mxu0 0
    %914 = vmatpush1.bf16.msra.mxu0 0
    %915 = vmatprep.subr.bf16.mxu0 0
    %916 = vmatpush1.bf16.msra.mxu0 0
    %917 = vmatprep.subr.bf16.mxu0 0
    %918 = vmatpush1.bf16.msra.mxu0 0
    %919 = vmatprep.subr.bf16.mxu0 0
    %920 = vmatpush1.bf16.msra.mxu0 0
    %921 = vmatprep.subr.bf16.mxu0 0
    %922 = vmatpush1.bf16.msra.mxu0 0
    %923 = vmatprep.subr.bf16.mxu0 0
    %924 = vmatpush1.bf16.msra.mxu0 0
    %925 = vmatprep.subr.bf16.mxu0 0
    %926 = vmatpush1.bf16.msra.mxu0 0
    %927 = vmatprep.mubr.bf16.mxu0 0
    %928 = vmatmul.mubr.bf16.gmra.mrb[0].mxu0 %v894
    %v929 = vpop.f32.mrb[0].mxu0
    %v930 = vadd.f32 0.0, %v929
    %v931 = vpop.f32.mrb[0].mxu0
    %v932 = vadd.f32 0.0, %v931
    %v933 = vpop.f32.mrb[0].mxu0
    %v934 = vpop.f32.mrb[0].mxu0
    %935 = vdwg.mxu0
    %936 = vmatprep.subr.bf16.mxu0 %v360
    %937 = vmatpush1.bf16.msra.mxu0 %v359
    %938 = vmatprep.subr.bf16.mxu0 %v364
    %939 = vmatpush1.bf16.msra.mxu0 %v363
    %940 = vmatprep.subr.bf16.mxu0 %v368
    %941 = vmatpush1.bf16.msra.mxu0 %v367
    %942 = vmatprep.subr.bf16.mxu0 %v372
    %943 = vmatpush1.bf16.msra.mxu0 %v371
    %944 = vmatprep.subr.bf16.mxu0 %v376
    %945 = vmatpush1.bf16.msra.mxu0 %v375
    %946 = vmatprep.subr.bf16.mxu0 %v380
    %947 = vmatpush1.bf16.msra.mxu0 %v379
    %948 = vmatprep.subr.bf16.mxu0 %v384
    %949 = vmatpush1.bf16.msra.mxu0 %v383
    %950 = vmatprep.subr.bf16.mxu0 %v388
    %951 = vmatpush1.bf16.msra.mxu0 %v387
    %952 = vmatprep.subr.bf16.mxu0 0
    %953 = vmatpush1.bf16.msra.mxu0 0
    %954 = vmatprep.subr.bf16.mxu0 0
    %955 = vmatpush1.bf16.msra.mxu0 0
    %956 = vmatprep.subr.bf16.mxu0 0
    %957 = vmatpush1.bf16.msra.mxu0 0
    %958 = vmatprep.subr.bf16.mxu0 0
    %959 = vmatpush1.bf16.msra.mxu0 0
    %960 = vmatprep.subr.bf16.mxu0 0
    %961 = vmatpush1.bf16.msra.mxu0 0
    %962 = vmatprep.subr.bf16.mxu0 0
    %963 = vmatpush1.bf16.msra.mxu0 0
    %964 = vmatprep.subr.bf16.mxu0 0
    %965 = vmatpush1.bf16.msra.mxu0 0
    %966 = vmatprep.subr.bf16.mxu0 0
    %967 = vmatpush1.bf16.msra.mxu0 0
    %968 = vmatprep.mubr.bf16.mxu0 0
    %969 = vmatmul.mubr.bf16.gmra.mrb[0].mxu0 %v894
    %v970 = vpop.f32.mrb[0].mxu0
    %v971 = vadd.f32 0.0, %v970
    %v972 = vpop.f32.mrb[0].mxu0
    %v973 = vadd.f32 0.0, %v972
    %v974 = vpop.f32.mrb[0].mxu0
    %v975 = vpop.f32.mrb[0].mxu0
    %976 = vdwg.mxu0
    %v977 = vadd.f32 %v930, %v508
    %v978 = vadd.f32 %v932, %v512
    %v979 = vxor.u32 %v977, 2147483648
    %v980 = vxor.u32 %v978, 2147483648
    %v981 = vmul.f32 %v979, 1.442695
    %v982 = vpow.pop %v981
    %v983 = vmul.f32 %v980, 1.442695
    %v984 = vpow.pop %v983
    %v985 = vadd.f32 %v982, 1.0
    %v986 = vadd.f32 %v984, 1.0
    %v987 = vrcp.pop %v985
    %v988 = vmul.f32 1.0, %v987
    %v989 = vrcp.pop %v986
    %v990 = vmul.f32 1.0, %v989
    %v991 = vtanh.pop %v978
    %v992 = vmul.f32 %v988, %v848
    %994 = vrot.lane.b32.xlu0 %v991, 64
    %v995 = vpop.permute.xlu0 %994
    %v997 = vmul.f32 %v988, %v995
    %999 = vrot.lane.b32.xlu0 %v997, 64
    %v1000 = vpop.permute.xlu0 %999
    %v1002 = vadd.f32 %v992, %v1000
    %v1003 = vtanh.pop %v1002
    %1005 = vrot.lane.b32.xlu0 %v1003, 64
    %v1006 = vpop.permute.xlu0 %1005
    %v1008 = vmul.f32 %v990, %v1006
    %v1009 = vld [vmem:[#allocation2 + $0x40] sm:$0xff]
    %v1010 = vld [vmem:[#allocation2 + $0x48] sm:$0xff]
    %v1011 = vadd.f32 %v1009, %v971
    %v1012 = vadd.f32 %v1010, %v973
    %v1013 = vxor.u32 %v1011, 2147483648
    %v1014 = vxor.u32 %v1012, 2147483648
    %v1015 = vmul.f32 %v1013, 1.442695
    %v1016 = vpow.pop %v1015
    %v1017 = vmul.f32 %v1014, 1.442695
    %v1018 = vpow.pop %v1017
    %v1019 = vadd.f32 %v1016, 1.0
    %v1020 = vadd.f32 %v1018, 1.0
    %v1021 = vrcp.pop %v1019
    %v1022 = vmul.f32 1.0, %v1021
    %v1023 = vrcp.pop %v1020
    %v1024 = vmul.f32 1.0, %v1023
    %v1025 = vtanh.pop %v1012
    %v1026 = vmul.f32 %v1022, %v882
    %1028 = vrot.lane.b32.xlu0 %v1025, 64
    %v1029 = vpop.permute.xlu0 %1028
    %v1031 = vmul.f32 %v1022, %v1029
    %1033 = vrot.lane.b32.xlu0 %v1031, 64
    %v1034 = vpop.permute.xlu0 %1033
    %v1036 = vadd.f32 %v1026, %v1034
    %v1037 = vtanh.pop %v1036
    %1039 = vrot.lane.b32.xlu0 %v1037, 64
    %v1040 = vpop.permute.xlu0 %1039
    %v1042 = vmul.f32 %v1024, %v1040
    %1044 = vrot.lane.b32.xlu0 %v1008, 64
    %v1045 = vpop.permute.xlu0 %1044
    %v1047 = vsel %vm226, %v1042, %v1045
    %v1048 = vpack.c.bf16 %v1047, %v1047
    %1049 = vmatprep.subr.bf16.mxu0 %v358
    %1050 = vmatpush1.bf16.msra.mxu0 %v357
    %1051 = vmatprep.subr.bf16.mxu0 %v362
    %1052 = vmatpush1.bf16.msra.mxu0 %v361
    %1053 = vmatprep.subr.bf16.mxu0 %v366
    %1054 = vmatpush1.bf16.msra.mxu0 %v365
    %1055 = vmatprep.subr.bf16.mxu0 %v370
    %1056 = vmatpush1.bf16.msra.mxu0 %v369
    %1057 = vmatprep.subr.bf16.mxu0 %v374
    %1058 = vmatpush1.bf16.msra.mxu0 %v373
    %1059 = vmatprep.subr.bf16.mxu0 %v378
    %1060 = vmatpush1.bf16.msra.mxu0 %v377
    %1061 = vmatprep.subr.bf16.mxu0 %v382
    %1062 = vmatpush1.bf16.msra.mxu0 %v381
    %1063 = vmatprep.subr.bf16.mxu0 %v386
    %1064 = vmatpush1.bf16.msra.mxu0 %v385
    %1065 = vmatprep.subr.bf16.mxu0 0
    %1066 = vmatpush1.bf16.msra.mxu0 0
    %1067 = vmatprep.subr.bf16.mxu0 0
    %1068 = vmatpush1.bf16.msra.mxu0 0
    %1069 = vmatprep.subr.bf16.mxu0 0
    %1070 = vmatpush1.bf16.msra.mxu0 0
    %1071 = vmatprep.subr.bf16.mxu0 0
    %1072 = vmatpush1.bf16.msra.mxu0 0
    %1073 = vmatprep.subr.bf16.mxu0 0
    %1074 = vmatpush1.bf16.msra.mxu0 0
    %1075 = vmatprep.subr.bf16.mxu0 0
    %1076 = vmatpush1.bf16.msra.mxu0 0
    %1077 = vmatprep.subr.bf16.mxu0 0
    %1078 = vmatpush1.bf16.msra.mxu0 0
    %1079 = vmatprep.subr.bf16.mxu0 0
    %1080 = vmatpush1.bf16.msra.mxu0 0
    %1081 = vmatprep.mubr.bf16.mxu0 0
    %1082 = vmatmul.mubr.bf16.gmra.mrb[0].mxu0 %v1048
    %v1083 = vpop.f32.mrb[0].mxu0
    %v1084 = vadd.f32 0.0, %v1083
    %v1085 = vpop.f32.mrb[0].mxu0
    %v1086 = vadd.f32 0.0, %v1085
    %v1087 = vpop.f32.mrb[0].mxu0
    %v1088 = vpop.f32.mrb[0].mxu0
    %1089 = vdwg.mxu0
    %1090 = vmatprep.subr.bf16.mxu0 %v360
    %1091 = vmatpush1.bf16.msra.mxu0 %v359
    %1092 = vmatprep.subr.bf16.mxu0 %v364
    %1093 = vmatpush1.bf16.msra.mxu0 %v363
    %1094 = vmatprep.subr.bf16.mxu0 %v368
    %1095 = vmatpush1.bf16.msra.mxu0 %v367
    %1096 = vmatprep.subr.bf16.mxu0 %v372
    %1097 = vmatpush1.bf16.msra.mxu0 %v371
    %1098 = vmatprep.subr.bf16.mxu0 %v376
    %1099 = vmatpush1.bf16.msra.mxu0 %v375
    %1100 = vmatprep.subr.bf16.mxu0 %v380
    %1101 = vmatpush1.bf16.msra.mxu0 %v379
    %1102 = vmatprep.subr.bf16.mxu0 %v384
    %1103 = vmatpush1.bf16.msra.mxu0 %v383
    %1104 = vmatprep.subr.bf16.mxu0 %v388
    %1105 = vmatpush1.bf16.msra.mxu0 %v387
    %1106 = vmatprep.subr.bf16.mxu0 0
    %1107 = vmatpush1.bf16.msra.mxu0 0
    %1108 = vmatprep.subr.bf16.mxu0 0
    %1109 = vmatpush1.bf16.msra.mxu0 0
    %1110 = vmatprep.subr.bf16.mxu0 0
    %1111 = vmatpush1.bf16.msra.mxu0 0
    %1112 = vmatprep.subr.bf16.mxu0 0
    %1113 = vmatpush1.bf16.msra.mxu0 0
    %1114 = vmatprep.subr.bf16.mxu0 0
    %1115 = vmatpush1.bf16.msra.mxu0 0
    %1116 = vmatprep.subr.bf16.mxu0 0
    %1117 = vmatpush1.bf16.msra.mxu0 0
    %1118 = vmatprep.subr.bf16.mxu0 0
    %1119 = vmatpush1.bf16.msra.mxu0 0
    %1120 = vmatprep.subr.bf16.mxu0 0
    %1121 = vmatpush1.bf16.msra.mxu0 0
    %1122 = vmatprep.mubr.bf16.mxu0 0
    %1123 = vmatmul.mubr.bf16.gmra.mrb[0].mxu0 %v1048
    %v1124 = vpop.f32.mrb[0].mxu0
    %v1125 = vadd.f32 0.0, %v1124
    %v1126 = vpop.f32.mrb[0].mxu0
    %v1127 = vadd.f32 0.0, %v1126
    %v1128 = vpop.f32.mrb[0].mxu0
    %v1129 = vpop.f32.mrb[0].mxu0
    %1130 = vdwg.mxu0
    %v1131 = vadd.f32 %v1084, %v508
    %v1132 = vadd.f32 %v1086, %v512
    %v1133 = vxor.u32 %v1131, 2147483648
    %v1134 = vxor.u32 %v1132, 2147483648
    %v1135 = vmul.f32 %v1133, 1.442695
    %v1136 = vpow.pop %v1135
    %v1137 = vmul.f32 %v1134, 1.442695
    %v1138 = vpow.pop %v1137
    %v1139 = vadd.f32 %v1136, 1.0
    %v1140 = vadd.f32 %v1138, 1.0
    %v1141 = vrcp.pop %v1139
    %v1142 = vmul.f32 1.0, %v1141
    %v1143 = vrcp.pop %v1140
    %v1144 = vmul.f32 1.0, %v1143
    %v1145 = vtanh.pop %v1132
    %v1146 = vmul.f32 %v1142, %v1002
    %1148 = vrot.lane.b32.xlu0 %v1145, 64
    %v1149 = vpop.permute.xlu0 %1148
    %v1151 = vmul.f32 %v1142, %v1149
    %1153 = vrot.lane.b32.xlu0 %v1151, 64
    %v1154 = vpop.permute.xlu0 %1153
    %v1156 = vadd.f32 %v1146, %v1154
    %v1157 = vtanh.pop %v1156
    %1159 = vrot.lane.b32.xlu0 %v1157, 64
    %v1160 = vpop.permute.xlu0 %1159
    %v1162 = vmul.f32 %v1144, %v1160
    %v1163 = vld [vmem:[#allocation2 + $0x50] sm:$0xff]
    %v1164 = vld [vmem:[#allocation2 + $0x58] sm:$0xff]
    %v1165 = vadd.f32 %v1163, %v1125
    %v1166 = vadd.f32 %v1164, %v1127
    %v1167 = vxor.u32 %v1165, 2147483648
    %v1168 = vxor.u32 %v1166, 2147483648
    %v1169 = vmul.f32 %v1167, 1.442695
    %v1170 = vpow.pop %v1169
    %v1171 = vmul.f32 %v1168, 1.442695
    %v1172 = vpow.pop %v1171
    %v1173 = vadd.f32 %v1170, 1.0
    %v1174 = vadd.f32 %v1172, 1.0
    %v1175 = vrcp.pop %v1173
    %v1176 = vmul.f32 1.0, %v1175
    %v1177 = vrcp.pop %v1174
    %v1178 = vmul.f32 1.0, %v1177
    %v1179 = vtanh.pop %v1166
    %v1180 = vmul.f32 %v1176, %v1036
    %1182 = vrot.lane.b32.xlu0 %v1179, 64
    %v1183 = vpop.permute.xlu0 %1182
    %v1185 = vmul.f32 %v1176, %v1183
    %1187 = vrot.lane.b32.xlu0 %v1185, 64
    %v1188 = vpop.permute.xlu0 %1187
    %v1190 = vadd.f32 %v1180, %v1188
    %v1191 = vtanh.pop %v1190
    %1193 = vrot.lane.b32.xlu0 %v1191, 64
    %v1194 = vpop.permute.xlu0 %1193
    %v1196 = vmul.f32 %v1178, %v1194
    %1198 = vrot.lane.b32.xlu0 %v1162, 64
    %v1199 = vpop.permute.xlu0 %1198
    %v1201 = vsel %vm226, %v1196, %v1199
    %v1202 = vpack.c.bf16 %v1201, %v1201
    %1203 = vmatprep.subr.bf16.mxu0 %v358
    %1204 = vmatpush1.bf16.msra.mxu0 %v357
    %1205 = vmatprep.subr.bf16.mxu0 %v362
    %1206 = vmatpush1.bf16.msra.mxu0 %v361
    %1207 = vmatprep.subr.bf16.mxu0 %v366
    %1208 = vmatpush1.bf16.msra.mxu0 %v365
    %1209 = vmatprep.subr.bf16.mxu0 %v370
    %1210 = vmatpush1.bf16.msra.mxu0 %v369
    %1211 = vmatprep.subr.bf16.mxu0 %v374
    %1212 = vmatpush1.bf16.msra.mxu0 %v373
    %1213 = vmatprep.subr.bf16.mxu0 %v378
    %1214 = vmatpush1.bf16.msra.mxu0 %v377
    %1215 = vmatprep.subr.bf16.mxu0 %v382
    %1216 = vmatpush1.bf16.msra.mxu0 %v381
    %1217 = vmatprep.subr.bf16.mxu0 %v386
    %1218 = vmatpush1.bf16.msra.mxu0 %v385
    %1219 = vmatprep.subr.bf16.mxu0 0
    %1220 = vmatpush1.bf16.msra.mxu0 0
    %1221 = vmatprep.subr.bf16.mxu0 0
    %1222 = vmatpush1.bf16.msra.mxu0 0
    %1223 = vmatprep.subr.bf16.mxu0 0
    %1224 = vmatpush1.bf16.msra.mxu0 0
    %1225 = vmatprep.subr.bf16.mxu0 0
    %1226 = vmatpush1.bf16.msra.mxu0 0
    %1227 = vmatprep.subr.bf16.mxu0 0
    %1228 = vmatpush1.bf16.msra.mxu0 0
    %1229 = vmatprep.subr.bf16.mxu0 0
    %1230 = vmatpush1.bf16.msra.mxu0 0
    %1231 = vmatprep.subr.bf16.mxu0 0
    %1232 = vmatpush1.bf16.msra.mxu0 0
    %1233 = vmatprep.subr.bf16.mxu0 0
    %1234 = vmatpush1.bf16.msra.mxu0 0
    %1235 = vmatprep.mubr.bf16.mxu0 0
    %1236 = vmatmul.mubr.bf16.gmra.mrb[0].mxu0 %v1202
    %v1237 = vpop.f32.mrb[0].mxu0
    %v1238 = vadd.f32 0.0, %v1237
    %v1239 = vpop.f32.mrb[0].mxu0
    %v1240 = vadd.f32 0.0, %v1239
    %v1241 = vpop.f32.mrb[0].mxu0
    %v1242 = vpop.f32.mrb[0].mxu0
    %1243 = vdwg.mxu0
    %1244 = vmatprep.subr.bf16.mxu0 %v360
    %1245 = vmatpush1.bf16.msra.mxu0 %v359
    %1246 = vmatprep.subr.bf16.mxu0 %v364
    %1247 = vmatpush1.bf16.msra.mxu0 %v363
    %1248 = vmatprep.subr.bf16.mxu0 %v368
    %1249 = vmatpush1.bf16.msra.mxu0 %v367
    %1250 = vmatprep.subr.bf16.mxu0 %v372
    %1251 = vmatpush1.bf16.msra.mxu0 %v371
    %1252 = vmatprep.subr.bf16.mxu0 %v376
    %1253 = vmatpush1.bf16.msra.mxu0 %v375
    %1254 = vmatprep.subr.bf16.mxu0 %v380
    %1255 = vmatpush1.bf16.msra.mxu0 %v379
    %1256 = vmatprep.subr.bf16.mxu0 %v384
    %1257 = vmatpush1.bf16.msra.mxu0 %v383
    %1258 = vmatprep.subr.bf16.mxu0 %v388
    %1259 = vmatpush1.bf16.msra.mxu0 %v387
    %1260 = vmatprep.subr.bf16.mxu0 0
    %1261 = vmatpush1.bf16.msra.mxu0 0
    %1262 = vmatprep.subr.bf16.mxu0 0
    %1263 = vmatpush1.bf16.msra.mxu0 0
    %1264 = vmatprep.subr.bf16.mxu0 0
    %1265 = vmatpush1.bf16.msra.mxu0 0
    %1266 = vmatprep.subr.bf16.mxu0 0
    %1267 = vmatpush1.bf16.msra.mxu0 0
    %1268 = vmatprep.subr.bf16.mxu0 0
    %1269 = vmatpush1.bf16.msra.mxu0 0
    %1270 = vmatprep.subr.bf16.mxu0 0
    %1271 = vmatpush1.bf16.msra.mxu0 0
    %1272 = vmatprep.subr.bf16.mxu0 0
    %1273 = vmatpush1.bf16.msra.mxu0 0
    %1274 = vmatprep.subr.bf16.mxu0 0
    %1275 = vmatpush1.bf16.msra.mxu0 0
    %1276 = vmatprep.mubr.bf16.mxu0 0
    %1277 = vmatmul.mubr.bf16.gmra.mrb[0].mxu0 %v1202
    %v1278 = vpop.f32.mrb[0].mxu0
    %v1279 = vadd.f32 0.0, %v1278
    %v1280 = vpop.f32.mrb[0].mxu0
    %v1281 = vadd.f32 0.0, %v1280
    %v1282 = vpop.f32.mrb[0].mxu0
    %v1283 = vpop.f32.mrb[0].mxu0
    %1284 = vdwg.mxu0
    %v1285 = vadd.f32 %v1238, %v508
    %v1286 = vadd.f32 %v1240, %v512
    %v1287 = vxor.u32 %v1285, 2147483648
    %v1288 = vxor.u32 %v1286, 2147483648
    %v1289 = vmul.f32 %v1287, 1.442695
    %v1290 = vpow.pop %v1289
    %v1291 = vmul.f32 %v1288, 1.442695
    %v1292 = vpow.pop %v1291
    %v1293 = vadd.f32 %v1290, 1.0
    %v1294 = vadd.f32 %v1292, 1.0
    %v1295 = vrcp.pop %v1293
    %v1296 = vmul.f32 1.0, %v1295
    %v1297 = vrcp.pop %v1294
    %v1298 = vmul.f32 1.0, %v1297
    %v1299 = vtanh.pop %v1286
    %v1300 = vmul.f32 %v1296, %v1156
    %1302 = vrot.lane.b32.xlu0 %v1299, 64
    %v1303 = vpop.permute.xlu0 %1302
    %v1305 = vmul.f32 %v1296, %v1303
    %1307 = vrot.lane.b32.xlu0 %v1305, 64
    %v1308 = vpop.permute.xlu0 %1307
    %v1310 = vadd.f32 %v1300, %v1308
    %v1311 = vtanh.pop %v1310
    %1313 = vrot.lane.b32.xlu0 %v1311, 64
    %v1314 = vpop.permute.xlu0 %1313
    %v1316 = vmul.f32 %v1298, %v1314
    %v1317 = vld [vmem:[#allocation2 + $0x60] sm:$0xff]
    %v1318 = vld [vmem:[#allocation2 + $0x68] sm:$0xff]
    %v1319 = vadd.f32 %v1317, %v1279
    %v1320 = vadd.f32 %v1318, %v1281
    %v1321 = vxor.u32 %v1319, 2147483648
    %v1322 = vxor.u32 %v1320, 2147483648
    %v1323 = vmul.f32 %v1321, 1.442695
    %v1324 = vpow.pop %v1323
    %v1325 = vmul.f32 %v1322, 1.442695
    %v1326 = vpow.pop %v1325
    %v1327 = vadd.f32 %v1324, 1.0
    %v1328 = vadd.f32 %v1326, 1.0
    %v1329 = vrcp.pop %v1327
    %v1330 = vmul.f32 1.0, %v1329
    %v1331 = vrcp.pop %v1328
    %v1332 = vmul.f32 1.0, %v1331
    %v1333 = vtanh.pop %v1320
    %v1334 = vmul.f32 %v1330, %v1190
    %1336 = vrot.lane.b32.xlu0 %v1333, 64
    %v1337 = vpop.permute.xlu0 %1336
    %v1339 = vmul.f32 %v1330, %v1337
    %1341 = vrot.lane.b32.xlu0 %v1339, 64
    %v1342 = vpop.permute.xlu0 %1341
    %v1344 = vadd.f32 %v1334, %v1342
    %v1345 = vtanh.pop %v1344
    %1347 = vrot.lane.b32.xlu0 %v1345, 64
    %v1348 = vpop.permute.xlu0 %1347
    %v1350 = vmul.f32 %v1332, %v1348
    %1352 = vrot.lane.b32.xlu0 %v1316, 64
    %v1353 = vpop.permute.xlu0 %1352
    %v1355 = vsel %vm226, %v1350, %v1353
    %v1356 = vpack.c.bf16 %v1355, %v1355
    %1357 = vmatprep.subr.bf16.mxu0 %v358
    %1358 = vmatpush1.bf16.msra.mxu0 %v357
    %1359 = vmatprep.subr.bf16.mxu0 %v362
    %1360 = vmatpush1.bf16.msra.mxu0 %v361
    %1361 = vmatprep.subr.bf16.mxu0 %v366
    %1362 = vmatpush1.bf16.msra.mxu0 %v365
    %1363 = vmatprep.subr.bf16.mxu0 %v370
    %1364 = vmatpush1.bf16.msra.mxu0 %v369
    %1365 = vmatprep.subr.bf16.mxu0 %v374
    %1366 = vmatpush1.bf16.msra.mxu0 %v373
    %1367 = vmatprep.subr.bf16.mxu0 %v378
    %1368 = vmatpush1.bf16.msra.mxu0 %v377
    %1369 = vmatprep.subr.bf16.mxu0 %v382
    %1370 = vmatpush1.bf16.msra.mxu0 %v381
    %1371 = vmatprep.subr.bf16.mxu0 %v386
    %1372 = vmatpush1.bf16.msra.mxu0 %v385
    %1373 = vmatprep.subr.bf16.mxu0 0
    %1374 = vmatpush1.bf16.msra.mxu0 0
    %1375 = vmatprep.subr.bf16.mxu0 0
    %1376 = vmatpush1.bf16.msra.mxu0 0
    %1377 = vmatprep.subr.bf16.mxu0 0
    %1378 = vmatpush1.bf16.msra.mxu0 0
    %1379 = vmatprep.subr.bf16.mxu0 0
    %1380 = vmatpush1.bf16.msra.mxu0 0
    %1381 = vmatprep.subr.bf16.mxu0 0
    %1382 = vmatpush1.bf16.msra.mxu0 0
    %1383 = vmatprep.subr.bf16.mxu0 0
    %1384 = vmatpush1.bf16.msra.mxu0 0
    %1385 = vmatprep.subr.bf16.mxu0 0
    %1386 = vmatpush1.bf16.msra.mxu0 0
    %1387 = vmatprep.subr.bf16.mxu0 0
    %1388 = vmatpush1.bf16.msra.mxu0 0
    %1389 = vmatprep.mubr.bf16.mxu0 0
    %1390 = vmatmul.mubr.bf16.gmra.mrb[0].mxu0 %v1356
    %v1391 = vpop.f32.mrb[0].mxu0
    %v1392 = vadd.f32 0.0, %v1391
    %v1393 = vpop.f32.mrb[0].mxu0
    %v1394 = vadd.f32 0.0, %v1393
    %v1395 = vpop.f32.mrb[0].mxu0
    %v1396 = vpop.f32.mrb[0].mxu0
    %1397 = vdwg.mxu0
    %1398 = vmatprep.subr.bf16.mxu0 %v360
    %1399 = vmatpush1.bf16.msra.mxu0 %v359
    %1400 = vmatprep.subr.bf16.mxu0 %v364
    %1401 = vmatpush1.bf16.msra.mxu0 %v363
    %1402 = vmatprep.subr.bf16.mxu0 %v368
    %1403 = vmatpush1.bf16.msra.mxu0 %v367
    %1404 = vmatprep.subr.bf16.mxu0 %v372
    %1405 = vmatpush1.bf16.msra.mxu0 %v371
    %1406 = vmatprep.subr.bf16.mxu0 %v376
    %1407 = vmatpush1.bf16.msra.mxu0 %v375
    %1408 = vmatprep.subr.bf16.mxu0 %v380
    %1409 = vmatpush1.bf16.msra.mxu0 %v379
    %1410 = vmatprep.subr.bf16.mxu0 %v384
    %1411 = vmatpush1.bf16.msra.mxu0 %v383
    %1412 = vmatprep.subr.bf16.mxu0 %v388
    %1413 = vmatpush1.bf16.msra.mxu0 %v387
    %1414 = vmatprep.subr.bf16.mxu0 0
    %1415 = vmatpush1.bf16.msra.mxu0 0
    %1416 = vmatprep.subr.bf16.mxu0 0
    %1417 = vmatpush1.bf16.msra.mxu0 0
    %1418 = vmatprep.subr.bf16.mxu0 0
    %1419 = vmatpush1.bf16.msra.mxu0 0
    %1420 = vmatprep.subr.bf16.mxu0 0
    %1421 = vmatpush1.bf16.msra.mxu0 0
    %1422 = vmatprep.subr.bf16.mxu0 0
    %1423 = vmatpush1.bf16.msra.mxu0 0
    %1424 = vmatprep.subr.bf16.mxu0 0
    %1425 = vmatpush1.bf16.msra.mxu0 0
    %1426 = vmatprep.subr.bf16.mxu0 0
    %1427 = vmatpush1.bf16.msra.mxu0 0
    %1428 = vmatprep.subr.bf16.mxu0 0
    %1429 = vmatpush1.bf16.msra.mxu0 0
    %1430 = vmatprep.mubr.bf16.mxu0 0
    %1431 = vmatmul.mubr.bf16.gmra.mrb[0].mxu0 %v1356
    %v1432 = vpop.f32.mrb[0].mxu0
    %v1433 = vadd.f32 0.0, %v1432
    %v1434 = vpop.f32.mrb[0].mxu0
    %v1435 = vadd.f32 0.0, %v1434
    %v1436 = vpop.f32.mrb[0].mxu0
    %v1437 = vpop.f32.mrb[0].mxu0
    %1438 = vdwg.mxu0
    %v1439 = vadd.f32 %v1392, %v508
    %v1440 = vadd.f32 %v1394, %v512
    %v1441 = vxor.u32 %v1439, 2147483648
    %v1442 = vxor.u32 %v1440, 2147483648
    %v1443 = vmul.f32 %v1441, 1.442695
    %v1444 = vpow.pop %v1443
    %v1445 = vmul.f32 %v1442, 1.442695
    %v1446 = vpow.pop %v1445
    %v1447 = vadd.f32 %v1444, 1.0
    %v1448 = vadd.f32 %v1446, 1.0
    %v1449 = vrcp.pop %v1447
    %v1450 = vmul.f32 1.0, %v1449
    %v1451 = vrcp.pop %v1448
    %v1452 = vmul.f32 1.0, %v1451
    %v1453 = vtanh.pop %v1440
    %v1454 = vmul.f32 %v1450, %v1310
    %1456 = vrot.lane.b32.xlu0 %v1453, 64
    %v1457 = vpop.permute.xlu0 %1456
    %v1459 = vmul.f32 %v1450, %v1457
    %1461 = vrot.lane.b32.xlu0 %v1459, 64
    %v1462 = vpop.permute.xlu0 %1461
    %v1464 = vadd.f32 %v1454, %v1462
    %v1465 = vtanh.pop %v1464
    %1467 = vrot.lane.b32.xlu0 %v1465, 64
    %v1468 = vpop.permute.xlu0 %1467
    %v1470 = vmul.f32 %v1452, %v1468
    %v1471 = vld [vmem:[#allocation2 + $0x70] sm:$0xff]
    %v1472 = vld [vmem:[#allocation2 + $0x78] sm:$0xff]
    %v1473 = vadd.f32 %v1471, %v1433
    %v1474 = vadd.f32 %v1472, %v1435
    %v1475 = vxor.u32 %v1473, 2147483648
    %v1476 = vxor.u32 %v1474, 2147483648
    %v1477 = vmul.f32 %v1475, 1.442695
    %v1478 = vpow.pop %v1477
    %v1479 = vmul.f32 %v1476, 1.442695
    %v1480 = vpow.pop %v1479
    %v1481 = vadd.f32 %v1478, 1.0
    %v1482 = vadd.f32 %v1480, 1.0
    %v1483 = vrcp.pop %v1481
    %v1484 = vmul.f32 1.0, %v1483
    %v1485 = vrcp.pop %v1482
    %v1486 = vmul.f32 1.0, %v1485
    %v1487 = vtanh.pop %v1474
    %v1488 = vmul.f32 %v1484, %v1344
    %1490 = vrot.lane.b32.xlu0 %v1487, 64
    %v1491 = vpop.permute.xlu0 %1490
    %v1493 = vmul.f32 %v1484, %v1491
    %1495 = vrot.lane.b32.xlu0 %v1493, 64
    %v1496 = vpop.permute.xlu0 %1495
    %v1498 = vadd.f32 %v1488, %v1496
    %v1499 = vtanh.pop %v1498
    %1501 = vrot.lane.b32.xlu0 %v1499, 64
    %v1502 = vpop.permute.xlu0 %1501
    %v1504 = vmul.f32 %v1486, %v1502
    %1506 = vrot.lane.b32.xlu0 %v1470, 64
    %v1507 = vpop.permute.xlu0 %1506
    %v1509 = vsel %vm226, %v1504, %v1507
    %v1510 = vpack.c.bf16 %v1509, %v1509
    %1511 = vmatprep.subr.bf16.mxu0 %v358
    %1512 = vmatpush1.bf16.msra.mxu0 %v357
    %1513 = vmatprep.subr.bf16.mxu0 %v362
    %1514 = vmatpush1.bf16.msra.mxu0 %v361
    %1515 = vmatprep.subr.bf16.mxu0 %v366
    %1516 = vmatpush1.bf16.msra.mxu0 %v365
    %1517 = vmatprep.subr.bf16.mxu0 %v370
    %1518 = vmatpush1.bf16.msra.mxu0 %v369
    %1519 = vmatprep.subr.bf16.mxu0 %v374
    %1520 = vmatpush1.bf16.msra.mxu0 %v373
    %1521 = vmatprep.subr.bf16.mxu0 %v378
    %1522 = vmatpush1.bf16.msra.mxu0 %v377
    %1523 = vmatprep.subr.bf16.mxu0 %v382
    %1524 = vmatpush1.bf16.msra.mxu0 %v381
    %1525 = vmatprep.subr.bf16.mxu0 %v386
    %1526 = vmatpush1.bf16.msra.mxu0 %v385
    %1527 = vmatprep.subr.bf16.mxu0 0
    %1528 = vmatpush1.bf16.msra.mxu0 0
    %1529 = vmatprep.subr.bf16.mxu0 0
    %1530 = vmatpush1.bf16.msra.mxu0 0
    %1531 = vmatprep.subr.bf16.mxu0 0
    %1532 = vmatpush1.bf16.msra.mxu0 0
    %1533 = vmatprep.subr.bf16.mxu0 0
    %1534 = vmatpush1.bf16.msra.mxu0 0
    %1535 = vmatprep.subr.bf16.mxu0 0
    %1536 = vmatpush1.bf16.msra.mxu0 0
    %1537 = vmatprep.subr.bf16.mxu0 0
    %1538 = vmatpush1.bf16.msra.mxu0 0
    %1539 = vmatprep.subr.bf16.mxu0 0
    %1540 = vmatpush1.bf16.msra.mxu0 0
    %1541 = vmatprep.subr.bf16.mxu0 0
    %1542 = vmatpush1.bf16.msra.mxu0 0
    %1543 = vmatprep.mubr.bf16.mxu0 0
    %1544 = vmatmul.mubr.bf16.gmra.mrb[0].mxu0 %v1510
    %v1545 = vpop.f32.mrb[0].mxu0
    %v1546 = vadd.f32 0.0, %v1545
    %v1547 = vpop.f32.mrb[0].mxu0
    %v1548 = vadd.f32 0.0, %v1547
    %v1549 = vpop.f32.mrb[0].mxu0
    %v1550 = vpop.f32.mrb[0].mxu0
    %1551 = vdwg.mxu0
    %v1552 = vadd.f32 %v1546, %v508
    %v1553 = vadd.f32 %v1548, %v512
    %v1554 = vxor.u32 %v1552, 2147483648
    %v1555 = vxor.u32 %v1553, 2147483648
    %v1556 = vmul.f32 %v1554, 1.442695
    %v1557 = vpow.pop %v1556
    %v1558 = vmul.f32 %v1555, 1.442695
    %v1559 = vpow.pop %v1558
    %v1560 = vadd.f32 %v1557, 1.0
    %v1561 = vadd.f32 %v1559, 1.0
    %v1562 = vrcp.pop %v1560
    %v1563 = vmul.f32 1.0, %v1562
    %v1564 = vrcp.pop %v1561
    %v1565 = vmul.f32 1.0, %v1564
    %v1566 = vtanh.pop %v1553
    %v1567 = vmul.f32 %v1563, %v1464
    %1569 = vrot.lane.b32.xlu0 %v1566, 64
    %v1570 = vpop.permute.xlu0 %1569
    %v1572 = vmul.f32 %v1563, %v1570
    %1574 = vrot.lane.b32.xlu0 %v1572, 64
    %v1575 = vpop.permute.xlu0 %1574
    %v1577 = vadd.f32 %v1567, %v1575
    %v1578 = vtanh.pop %v1577
    %1580 = vrot.lane.b32.xlu0 %v1578, 64
    %v1581 = vpop.permute.xlu0 %1580
    %v1583 = vmul.f32 %v1565, %v1581
    %v1584 = vpack.c.bf16 %v1583, %v1583
    %v1585 = vld [vmem:[%s5] sm:$0xf]
    %v1586 = vld [vmem:[%s5 + $0x4] sm:$0xf]
    %v1587 = vld [vmem:[%s5 + $0x8] sm:$0xf]
    %v1588 = vld [vmem:[%s5 + $0xc] sm:$0xf]
    %v1589 = vld [vmem:[%s5 + $0x10] sm:$0xf]
    %v1590 = vld [vmem:[%s5 + $0x14] sm:$0xf]
    %v1591 = vld [vmem:[%s5 + $0x18] sm:$0xf]
    %v1592 = vld [vmem:[%s5 + $0x1c] sm:$0xf]
    %v1593 = vld [vmem:[%s6] sm:$0x1]
    %v1595 = vlaneseq
    %v1596 = vshrl.u32 %v1595, 7
    %v1597 = vsub.s32 0, %v1596
    %v1598 = vrot.slane %v1593, %v1597
    %v1608 = vunpack.c.l.b16 %v1585
    %v1609 = vunpack.c.l.b16 %v1586
    %v1610 = vunpack.c.l.b16 %v1587
    %v1611 = vunpack.c.l.b16 %v1588
    %v1612 = vunpack.c.l.b16 %v1589
    %v1613 = vunpack.c.l.b16 %v1590
    %v1614 = vunpack.c.l.b16 %v1591
    %v1615 = vunpack.c.l.b16 %v1592
    %v1616 = vpack.c.b16 %v1609, %v1608
    %v1617 = vpack.c.b16 %v1611, %v1610
    %v1618 = vpack.c.b16 %v1613, %v1612
    %v1619 = vpack.c.b16 %v1615, %v1614
    %v1625 = vsel %vm226, %v1584, 0
    %1627 = vmatprep.subr.bf16.mxu0 0
    %1628 = vmatpush1.bf16.msra.mxu0 %v1616
    %1629 = vmatprep.subr.bf16.mxu0 0
    %1630 = vmatpush1.bf16.msra.mxu0 %v1617
    %1631 = vmatprep.subr.bf16.mxu0 0
    %1632 = vmatpush1.bf16.msra.mxu0 %v1618
    %1633 = vmatprep.subr.bf16.mxu0 0
    %1634 = vmatpush1.bf16.msra.mxu0 %v1619
    %1635 = vmatprep.subr.bf16.mxu0 0
    %1636 = vmatpush1.bf16.msra.mxu0 0
    %1637 = vmatprep.subr.bf16.mxu0 0
    %1638 = vmatpush1.bf16.msra.mxu0 0
    %1639 = vmatprep.subr.bf16.mxu0 0
    %1640 = vmatpush1.bf16.msra.mxu0 0
    %1641 = vmatprep.subr.bf16.mxu0 0
    %1642 = vmatpush1.bf16.msra.mxu0 0
    %1643 = vmatprep.subr.bf16.mxu0 0
    %1644 = vmatpush1.bf16.msra.mxu0 0
    %1645 = vmatprep.subr.bf16.mxu0 0
    %1646 = vmatpush1.bf16.msra.mxu0 0
    %1647 = vmatprep.subr.bf16.mxu0 0
    %1648 = vmatpush1.bf16.msra.mxu0 0
    %1649 = vmatprep.subr.bf16.mxu0 0
    %1650 = vmatpush1.bf16.msra.mxu0 0
    %1651 = vmatprep.subr.bf16.mxu0 0
    %1652 = vmatpush1.bf16.msra.mxu0 0
    %1653 = vmatprep.subr.bf16.mxu0 0
    %1654 = vmatpush1.bf16.msra.mxu0 0
    %1655 = vmatprep.subr.bf16.mxu0 0
    %1656 = vmatpush1.bf16.msra.mxu0 0
    %1657 = vmatprep.subr.bf16.mxu0 0
    %1658 = vmatpush1.bf16.msra.mxu0 0
    %1659 = vmatprep.mubr.bf16.mxu0 0
    %1660 = vmatmul.mubr.bf16.gmra.mrb[0].mxu0 %v1625
    %v1661 = vpop.f32.mrb[0].mxu0
    %v1662 = vadd.f32 %v1598, %v1661
    %v1663 = vpop.f32.mrb[0].mxu0
    %v1664 = vpop.f32.mrb[0].mxu0
    %v1665 = vpop.f32.mrb[0].mxu0
    %1666 = vdwg.mxu0
    %v1667 = vmax.f32 %v1662, 0.0
    %v1668 = vpack.c.bf16 %v1667, %v1667
    %v1669 = vld [vmem:[%s7] sm:$0xf]
    %v1670 = vld [vmem:[%s7 + $0x4] sm:$0xf]
    %v1671 = vld [vmem:[%s7 + $0x8] sm:$0xf]
    %v1672 = vld [vmem:[%s7 + $0xc] sm:$0xf]
    %v1673 = vld [vmem:[#allocation3] sm:$0x1]
    %v1675 = vlaneseq
    %v1676 = vshrl.u32 %v1675, 7
    %v1677 = vsub.s32 0, %v1676
    %v1678 = vrot.slane %v1673, %v1677
    %v1684 = vunpack.c.l.b16 %v1669
    %v1685 = vunpack.c.l.b16 %v1670
    %v1686 = vunpack.c.l.b16 %v1671
    %v1687 = vunpack.c.l.b16 %v1672
    %v1688 = vpack.c.b16 %v1685, %v1684
    %v1689 = vpack.c.b16 %v1687, %v1686
    %vm1692 = vcmask 261120
    %v1694 = vsel %vm1692, %v1668, 0
    %1696 = vmatprep.subr.bf16.mxu0 0
    %1697 = vmatpush1.bf16.msra.mxu0 %v1688
    %1698 = vmatprep.subr.bf16.mxu0 0
    %1699 = vmatpush1.bf16.msra.mxu0 %v1689
    %1700 = vmatprep.subr.bf16.mxu0 0
    %1701 = vmatpush1.bf16.msra.mxu0 0
    %1702 = vmatprep.subr.bf16.mxu0 0
    %1703 = vmatpush1.bf16.msra.mxu0 0
    %1704 = vmatprep.subr.bf16.mxu0 0
    %1705 = vmatpush1.bf16.msra.mxu0 0
    %1706 = vmatprep.subr.bf16.mxu0 0
    %1707 = vmatpush1.bf16.msra.mxu0 0
    %1708 = vmatprep.subr.bf16.mxu0 0
    %1709 = vmatpush1.bf16.msra.mxu0 0
    %1710 = vmatprep.subr.bf16.mxu0 0
    %1711 = vmatpush1.bf16.msra.mxu0 0
    %1712 = vmatprep.subr.bf16.mxu0 0
    %1713 = vmatpush1.bf16.msra.mxu0 0
    %1714 = vmatprep.subr.bf16.mxu0 0
    %1715 = vmatpush1.bf16.msra.mxu0 0
    %1716 = vmatprep.subr.bf16.mxu0 0
    %1717 = vmatpush1.bf16.msra.mxu0 0
    %1718 = vmatprep.subr.bf16.mxu0 0
    %1719 = vmatpush1.bf16.msra.mxu0 0
    %1720 = vmatprep.subr.bf16.mxu0 0
    %1721 = vmatpush1.bf16.msra.mxu0 0
    %1722 = vmatprep.subr.bf16.mxu0 0
    %1723 = vmatpush1.bf16.msra.mxu0 0
    %1724 = vmatprep.subr.bf16.mxu0 0
    %1725 = vmatpush1.bf16.msra.mxu0 0
    %1726 = vmatprep.subr.bf16.mxu0 0
    %1727 = vmatpush1.bf16.msra.mxu0 0
    %1728 = vmatprep.mubr.bf16.mxu0 0
    %1729 = vmatmul.mubr.bf16.gmra.mrb[0].mxu0 %v1694
    %v1730 = vpop.f32.mrb[0].mxu0
    %v1731 = vadd.f32 %v1678, %v1730
    %v1732 = vpop.f32.mrb[0].mxu0
    %v1733 = vpop.f32.mrb[0].mxu0
    %v1734 = vpop.f32.mrb[0].mxu0
    %1735 = vdwg.mxu0
    %vm1736 = vcmask 7168
    %1737 = vst.msk [vmem:[%s9] sm:$0xff] %vm1736, %v1731
    // Predicated region
    $region42: #{lstm_power_forward.1} parent=1 // pred_check
      _
    $region43: #{lstm_power_forward.1} parent=1 // pred_check_branch
      %1739 = sbr.rel (0) target = $region45
    $region44: #{lstm_power_forward.1} parent=1 // pred_region
      _
    $region45: #{lstm_power_forward.1} parent=1 // pred_fallthru
      _
    // Predicated region
    $region46: #{lstm_power_forward.1} parent=1 // pred_check
      _
    $region47: #{lstm_power_forward.1} parent=1 // pred_check_branch
      %1741 = sbr.rel (0) target = $region49
    $region48: #{lstm_power_forward.1} parent=1 // pred_region
      _
    $region49: #{lstm_power_forward.1} parent=1 // pred_fallthru
      _
    %1742 = vsyncpa [#allocation5], 1

</llo_original>
